<compile_context>
chip_gen: v5e
topology: v5e:2x2
jax: 0.10.0
libtpu: 0.0.40
codegen_flags: <defaults>
</compile_context>

<pallas_src>
import functools

import numpy as np

import jax
import jax.numpy as jnp
from jax.experimental import pallas as pl
from jax.experimental.pallas import tpu as pltpu


_GATHER_SLOTS = 8  # outstanding row DMAs for the in-kernel embedding gather


# ----------------------------------------------------------------------------
# Fused kernel: gather + conv(all windows) + ReLU + max-pool + fc for one block.
# ----------------------------------------------------------------------------
def _textcnn_fused_kernel(
    ids_ref,              # SMEM (B_pad*S_pad,) int32    scalar-prefetched token ids
    embed_hbm,            # HBM  (vocab, E) f32          embedding table (pl.ANY)
    w_ref,                # VMEM (E, Ktot*C) bf16        packed conv weights
    tap_ref,              # VMEM (max_win, Ktot*C) f32   per-tap column masks
    grp_ref,              # VMEM (Ktot*C, n_wins*C) f32  tap-group-sum matrix
    bias_ref,             # VMEM (1, n_wins*C) f32       packed conv bias
    tval_ref,             # VMEM (S_pad, n_wins*C) f32   valid-time mask
    fcw_ref,              # VMEM (n_wins*C, O_pad) f32   fc weight (lane-padded)
    fcb_ref,              # VMEM (1, O_pad) f32          fc bias (lane-padded)
    out_ref,              # VMEM (1, Bb, O_pad) f32
    emb_buf,              # VMEM scratch (Bb*S_pad, E) f32
    sem,                  # DMA semaphores (_GATHER_SLOTS,)
    *, block_b, s_pad, max_win):
  n_rows = block_b * s_pad
  base = pl.program_id(0) * n_rows

  # ---- in-kernel embedding gather: one row DMA per token, shallow pipeline ----
  def start_row(t):
    tok = ids_ref[base + t]
    pltpu.make_async_copy(embed_hbm.at[pl.ds(tok, 1)],
                          emb_buf.at[pl.ds(t, 1)],
                          sem.at[t % _GATHER_SLOTS]).start()

  for t in range(min(_GATHER_SLOTS, n_rows)):          # prologue (static unroll)
    start_row(t)

  @pl.loop(0, n_rows)
  def _(t):
    # wait for row t (same copy size / semaphore slot as its start)
    pltpu.make_async_copy(embed_hbm.at[pl.ds(0, 1)],
                          emb_buf.at[pl.ds(t, 1)],
                          sem.at[t % _GATHER_SLOTS]).wait()

    @pl.when(t + _GATHER_SLOTS < n_rows)
    def _():
      start_row(t + _GATHER_SLOTS)

  # ---- conv projections: ONE MXU matmul for every (window, tap) column group --
  emb = emb_buf[...].astype(jnp.bfloat16)              # cast AFTER the gather
  proj = jnp.dot(emb, w_ref[...], preferred_element_type=jnp.float32)  # (n, Ktot*C)

  # ---- lane-dense shifted-tap accumulation (no narrow channel slices):
  #   shifted[r, col] = proj[r + tap(col), col]
  # Rows whose taps would run past a sequence end only feed invalid time
  # positions, which the valid-time mask zeroes below.
  shifted = proj * tap_ref[0]
  if max_win > 1:
    zpad = jnp.zeros((max_win - 1, proj.shape[1]), jnp.float32)
    proj_ext = jnp.concatenate([proj, zpad], axis=0)
    for k in range(1, max_win):                        # full-lane-width time shifts
      shifted = shifted + proj_ext[k:k + n_rows] * tap_ref[k]

  # ---- per-window tap sums on the (idle) MXU: replaces per-window channel
  # slicing and the pooled-feature lane concat.
  conv = jnp.dot(shifted, grp_ref[...], preferred_element_type=jnp.float32)
  conv = jnp.maximum(conv + bias_ref[...], 0.0)        # bias + ReLU (f32)
  conv = conv.reshape(block_b, s_pad, conv.shape[-1])  # free view (S_pad % 8 == 0)
  conv = conv * tval_ref[...]                          # zero invalid time positions
  feat = jnp.max(conv, axis=1)                         # max-pool over time (Bb, nw*C)

  # dropout -> identity (eval/inference mode)
  logits = jnp.dot(feat, fcw_ref[...], preferred_element_type=jnp.float32)
  out_ref[0] = logits + fcb_ref[...]                   # lane-dense (Bb, O_pad) store


# ----------------------------------------------------------------------------
# One-time parameter packing (hoisted out of the per-call path).
# ----------------------------------------------------------------------------
def pack_textcnn_params(params, kernel_wins):
  kernel_wins = tuple(int(w) for w in kernel_wins)
  E = params["embed"].shape[1]
  C = params[f"conv{kernel_wins[0]}_w"].shape[-1]
  O = params["fc_w"].shape[1]
  n_wins = len(kernel_wins)
  ktot = sum(kernel_wins)
  max_win = max(kernel_wins)

  # packed conv weights: (E, Ktot*C), columns grouped [window][tap][channel]
  w_all = jnp.concatenate(
      [params[f"conv{w}_w"].transpose(1, 0, 2).reshape(E, w * C)
       for w in kernel_wins], axis=1).astype(jnp.bfloat16)
  b_all = jnp.concatenate([params[f"conv{w}_b"] for w in kernel_wins],
                          axis=1).astype(jnp.float32)            # (1, n_wins*C)

  # host-side constant maps over packed columns
  col_tap = np.concatenate([np.repeat(np.arange(w), C) for w in kernel_wins])
  col_win = np.concatenate([np.full(w * C, i) for i, w in enumerate(kernel_wins)])
  col_chan = np.concatenate([np.tile(np.arange(C), w) for w in kernel_wins])

  tap_masks = (col_tap[None, :] == np.arange(max_win)[:, None]).astype(np.float32)
  gmat = np.zeros((ktot * C, n_wins * C), np.float32)
  gmat[np.arange(ktot * C), col_win * C + col_chan] = 1.0

  # fc weights padded to a lane-dense output width
  o_pad = max(128, -(-O // 128) * 128)
  fc_w = np.zeros((n_wins * C, o_pad), np.float32)
  fc_w[:, :O] = np.asarray(params["fc_w"], np.float32)
  fc_b = np.zeros((1, o_pad), np.float32)
  fc_b[:, :O] = np.asarray(params["fc_b"], np.float32)

  return dict(
      embed=params["embed"].astype(jnp.float32),   # stays f32 in HBM, gathered in-kernel
      w_all=w_all, b_all=b_all,
      tap_masks=jnp.asarray(tap_masks), gmat=jnp.asarray(gmat),
      fc_w=jnp.asarray(fc_w), fc_b=jnp.asarray(fc_b),
      kernel_wins=kernel_wins, channels=C, num_class=O)


# ----------------------------------------------------------------------------
# Forward wrapper: block the batch, launch one pallas_call.
# ----------------------------------------------------------------------------
def textcnn_forward(token_ids, packed, *, target_blocks=2,
                    vmem_budget_bytes=24 << 20):
  kernel_wins = packed["kernel_wins"]
  C = packed["channels"]
  O = packed["num_class"]
  o_pad = packed["fc_w"].shape[1]
  E = packed["embed"].shape[1]
  ktot = sum(kernel_wins)
  max_win = max(kernel_wins)

  B, S = token_ids.shape
  assert S >= max_win, "seq_len must be >= max(kernel_wins)"

  s_pad = -(-S // 8) * 8                        # sublane-aligned time axis

  # Block size: as large as the VMEM budget allows; keep >= target_blocks grid
  # steps when the batch allows (v7x: one big block per TensorCore, do NOT
  # shrink blocks just to add steps).
  per_row = s_pad * (E * 4 + 5 * ktot * C * 4)  # gather row + f32 working set
  bb = max(1, min(B, vmem_budget_bytes // max(per_row, 1)))
  bb = min(bb, max(1, -(-B // target_blocks)))
  b_align = max(1, 256 // s_pad)                # aim for Bb*S multiple of 256
  if bb > b_align:
    bb = (bb // b_align) * b_align
  n_blocks = -(-B // bb)
  b_pad = n_blocks * bb

  ids = jnp.zeros((b_pad, s_pad), jnp.int32)
  ids = ids.at[:B, :S].set(token_ids.astype(jnp.int32))
  ids_flat = ids.reshape(-1)

  # valid-time mask: position l is valid for window w iff l <= S - w
  win_of_col = np.repeat(np.asarray(kernel_wins, np.int32), C)
  tval = (np.arange(s_pad)[:, None] <= (S - win_of_col)[None, :]).astype(np.float32)

  kernel = functools.partial(_textcnn_fused_kernel,
                             block_b=bb, s_pad=s_pad, max_win=max_win)

  grid_spec = pltpu.PrefetchScalarGridSpec(
      num_scalar_prefetch=1,
      grid=(n_blocks,),
      in_specs=[
          pl.BlockSpec(memory_space=pl.ANY),                       # embed table (HBM)
          pl.BlockSpec(packed["w_all"].shape, lambda i, ids: (0, 0)),
          pl.BlockSpec(packed["tap_masks"].shape, lambda i, ids: (0, 0)),
          pl.BlockSpec(packed["gmat"].shape, lambda i, ids: (0, 0)),
          pl.BlockSpec(packed["b_all"].shape, lambda i, ids: (0, 0)),
          pl.BlockSpec(tval.shape, lambda i, ids: (0, 0)),
          pl.BlockSpec(packed["fc_w"].shape, lambda i, ids: (0, 0)),
          pl.BlockSpec(packed["fc_b"].shape, lambda i, ids: (0, 0)),
      ],
      out_specs=pl.BlockSpec((1, bb, o_pad), lambda i, ids: (i, 0, 0)),
      scratch_shapes=[
          pltpu.VMEM((bb * s_pad, E), jnp.float32),
          pltpu.SemaphoreType.DMA((_GATHER_SLOTS,)),
      ],
  )

  # explicit VMEM limit (raises v5e's 16 MiB default; stays under v7x's 64 MiB)
  vmem_need = bb * per_row + 2 * sum(
      int(np.prod(packed[k].shape)) * packed[k].dtype.itemsize
      for k in ("w_all", "tap_masks", "gmat", "b_all", "fc_w", "fc_b"))
  vmem_limit = int(min(56 << 20, max(32 << 20, 2 * vmem_need)))

  out = pl.pallas_call(
      kernel,
      out_shape=jax.ShapeDtypeStruct((n_blocks, bb, o_pad), jnp.float32),
      grid_spec=grid_spec,
      compiler_params=pltpu.CompilerParams(
          dimension_semantics=("parallel",),
          vmem_limit_bytes=vmem_limit),
  )(ids_flat, packed["embed"], packed["w_all"], packed["tap_masks"],
    packed["gmat"], packed["b_all"], jnp.asarray(tval),
    packed["fc_w"], packed["fc_b"])

  return out.reshape(b_pad, o_pad)[:B, :O]


# ----------------------------------------------------------------------------
# Pure-JAX f32 reference for correctness checking.
# ----------------------------------------------------------------------------
def textcnn_reference(token_ids, params, kernel_wins):
  emb = jnp.take(params["embed"], token_ids, axis=0)          # (B, S, E) f32
  pooled = []
  for w in kernel_wins:
    W = params[f"conv{w}_w"]                                  # (w, E, C)
    b = params[f"conv{w}_b"][0]                               # (C,)
    B, S, E = emb.shape
    L = S - w + 1
    acc = jnp.zeros((B, L, W.shape[-1]), jnp.float32) + b
    for k in range(w):
      acc = acc + jnp.einsum("ble,ec->blc", emb[:, k:k + L, :], W[k])
    acc = jnp.maximum(acc, 0.0)
    pooled.append(jnp.max(acc, axis=1))
  feat = jnp.concatenate(pooled, axis=1)
  return feat @ params["fc_w"] + params["fc_b"]


if __name__ == "__main__":
  # Small, deterministic configuration consistent with the module.
  vocab_size = 50
  emb_dim = 32
  dim_channel = 8
  kernel_wins = (3, 4, 5)
  num_class = 4
  batch = 8
  seq_len = 16

  key = jax.random.PRNGKey(0)
  keys = jax.random.split(key, 10)

  params = {
      "embed": 0.1 * jax.random.normal(keys[0], (vocab_size, emb_dim), jnp.float32),
      "fc_w": 0.1 * jax.random.normal(
          keys[1], (len(kernel_wins) * dim_channel, num_class), jnp.float32),
      "fc_b": 0.1 * jax.random.normal(keys[2], (1, num_class), jnp.float32),
  }
  for i, w in enumerate(kernel_wins):
    params[f"conv{w}_w"] = 0.1 * jax.random.normal(
        keys[3 + i], (w, emb_dim, dim_channel), jnp.float32)
    params[f"conv{w}_b"] = 0.1 * jax.random.normal(
        keys[6 + i], (1, dim_channel), jnp.float32)

  token_ids = jax.random.randint(keys[9], (batch, seq_len), 0, vocab_size, jnp.int32)

  packed = pack_textcnn_params(params, kernel_wins)   # one-time packing
  logits = textcnn_forward(token_ids, packed, target_blocks=2)
  logits = jax.block_until_ready(logits)

  ref = textcnn_reference(token_ids, params, kernel_wins)
  assert logits.shape == (batch, num_class)
  assert jnp.allclose(logits, ref, atol=2e-2, rtol=2e-2), (logits, ref)

  print("KERNEL_OK")
</pallas_src>

<mosaic_0001>
module attributes {stable_mosaic.version = 11 : i64} {
  func.func @_textcnn_fused_kernel(%arg0: i32, %arg1: memref<128xi32, #tpu.memory_space<smem>>, %arg2: memref<50x32xf32, #tpu.memory_space<any>>, %arg3: memref<32x96xbf16, #tpu.memory_space<vmem>>, %arg4: memref<5x96xf32, #tpu.memory_space<vmem>>, %arg5: memref<96x24xf32, #tpu.memory_space<vmem>>, %arg6: memref<1x24xf32, #tpu.memory_space<vmem>>, %arg7: memref<16x24xf32, #tpu.memory_space<vmem>>, %arg8: memref<24x128xf32, #tpu.memory_space<vmem>>, %arg9: memref<1x128xf32, #tpu.memory_space<vmem>>, %arg10: memref<1x4x128xf32, #tpu.memory_space<vmem>>, %arg11: memref<64x32xf32, #tpu.memory_space<vmem>>, %arg12: memref<8x!tpu.dma_semaphore, #tpu.memory_space<semaphore_mem>>) attributes {dimension_semantics = [#tpu.dimension_semantics<parallel>], iteration_bounds = array<i64: 2>, scalar_prefetch = 1 : i64, scratch_operands = 2 : i64, tpu.core_type = #tpu.core_type<tc>, window_params = [{}, {pipeline_mode = #tpu.pipeline_mode<synchronous>, transform_indices = @transform_1, window_bounds = array<i64: 32, 96>}, {pipeline_mode = #tpu.pipeline_mode<synchronous>, transform_indices = @transform_2, window_bounds = array<i64: 5, 96>}, {pipeline_mode = #tpu.pipeline_mode<synchronous>, transform_indices = @transform_3, window_bounds = array<i64: 96, 24>}, {pipeline_mode = #tpu.pipeline_mode<synchronous>, transform_indices = @transform_4, window_bounds = array<i64: 1, 24>}, {pipeline_mode = #tpu.pipeline_mode<synchronous>, transform_indices = @transform_5, window_bounds = array<i64: 16, 24>}, {pipeline_mode = #tpu.pipeline_mode<synchronous>, transform_indices = @transform_6, window_bounds = array<i64: 24, 128>}, {pipeline_mode = #tpu.pipeline_mode<synchronous>, transform_indices = @transform_7, window_bounds = array<i64: 1, 128>}, {transform_indices = @transform_8, window_bounds = array<i64: 1, 4, 128>}]} {
    %c64_i32 = arith.constant 64 : i32
    %0 = arith.muli %arg0, %c64_i32 : i32
    %c0_i32 = arith.constant 0 : i32
    %1 = arith.addi %0, %c0_i32 : i32
    %2 = arith.index_cast %1 : i32 to index
    %3 = memref.load %arg1[%2] : memref<128xi32, #tpu.memory_space<smem>>
    %c0_i32_0 = arith.constant 0 : i32
    %c0_i32_1 = arith.constant 0 : i32
    %4 = tpu.memref_slice %arg2[%3, %c0_i32_1] : memref<50x32xf32, #tpu.memory_space<any>> -> memref<1x32xf32, #tpu.memory_space<any>>
    %c0_i32_2 = arith.constant 0 : i32
    %c0_i32_3 = arith.constant 0 : i32
    %5 = tpu.memref_slice %arg11[%c0_i32_2, %c0_i32_3] : memref<64x32xf32, #tpu.memory_space<vmem>> -> memref<1x32xf32, #tpu.memory_space<vmem>>
    %6 = tpu.memref_slice %arg12[%c0_i32_0] : memref<8x!tpu.dma_semaphore, #tpu.memory_space<semaphore_mem>> -> memref<1x!tpu.dma_semaphore, #tpu.memory_space<semaphore_mem>>
    %7 = tpu.memref_squeeze %6 : memref<1x!tpu.dma_semaphore, #tpu.memory_space<semaphore_mem>> -> memref<!tpu.dma_semaphore, #tpu.memory_space<semaphore_mem>>
    tpu.enqueue_dma source(%4 : memref<1x32xf32, #tpu.memory_space<any>>) target(%5 : memref<1x32xf32, #tpu.memory_space<vmem>>) target_semaphore(%7 : memref<!tpu.dma_semaphore, #tpu.memory_space<semaphore_mem>>)
    %c1_i32 = arith.constant 1 : i32
    %8 = arith.addi %0, %c1_i32 : i32
    %9 = arith.index_cast %8 : i32 to index
    %10 = memref.load %arg1[%9] : memref<128xi32, #tpu.memory_space<smem>>
    %c1_i32_4 = arith.constant 1 : i32
    %c0_i32_5 = arith.constant 0 : i32
    %11 = tpu.memref_slice %arg2[%10, %c0_i32_5] : memref<50x32xf32, #tpu.memory_space<any>> -> memref<1x32xf32, #tpu.memory_space<any>>
    %c1_i32_6 = arith.constant 1 : i32
    %c0_i32_7 = arith.constant 0 : i32
    %12 = tpu.memref_slice %arg11[%c1_i32_6, %c0_i32_7] : memref<64x32xf32, #tpu.memory_space<vmem>> -> memref<1x32xf32, #tpu.memory_space<vmem>>
    %13 = tpu.memref_slice %arg12[%c1_i32_4] : memref<8x!tpu.dma_semaphore, #tpu.memory_space<semaphore_mem>> -> memref<1x!tpu.dma_semaphore, #tpu.memory_space<semaphore_mem>>
    %14 = tpu.memref_squeeze %13 : memref<1x!tpu.dma_semaphore, #tpu.memory_space<semaphore_mem>> -> memref<!tpu.dma_semaphore, #tpu.memory_space<semaphore_mem>>
    tpu.enqueue_dma source(%11 : memref<1x32xf32, #tpu.memory_space<any>>) target(%12 : memref<1x32xf32, #tpu.memory_space<vmem>>) target_semaphore(%14 : memref<!tpu.dma_semaphore, #tpu.memory_space<semaphore_mem>>)
    %c2_i32 = arith.constant 2 : i32
    %15 = arith.addi %0, %c2_i32 : i32
    %16 = arith.index_cast %15 : i32 to index
    %17 = memref.load %arg1[%16] : memref<128xi32, #tpu.memory_space<smem>>
    %c2_i32_8 = arith.constant 2 : i32
    %c0_i32_9 = arith.constant 0 : i32
    %18 = tpu.memref_slice %arg2[%17, %c0_i32_9] : memref<50x32xf32, #tpu.memory_space<any>> -> memref<1x32xf32, #tpu.memory_space<any>>
    %c2_i32_10 = arith.constant 2 : i32
    %c0_i32_11 = arith.constant 0 : i32
    %19 = tpu.memref_slice %arg11[%c2_i32_10, %c0_i32_11] : memref<64x32xf32, #tpu.memory_space<vmem>> -> memref<1x32xf32, #tpu.memory_space<vmem>>
    %20 = tpu.memref_slice %arg12[%c2_i32_8] : memref<8x!tpu.dma_semaphore, #tpu.memory_space<semaphore_mem>> -> memref<1x!tpu.dma_semaphore, #tpu.memory_space<semaphore_mem>>
    %21 = tpu.memref_squeeze %20 : memref<1x!tpu.dma_semaphore, #tpu.memory_space<semaphore_mem>> -> memref<!tpu.dma_semaphore, #tpu.memory_space<semaphore_mem>>
    tpu.enqueue_dma source(%18 : memref<1x32xf32, #tpu.memory_space<any>>) target(%19 : memref<1x32xf32, #tpu.memory_space<vmem>>) target_semaphore(%21 : memref<!tpu.dma_semaphore, #tpu.memory_space<semaphore_mem>>)
    %c3_i32 = arith.constant 3 : i32
    %22 = arith.addi %0, %c3_i32 : i32
    %23 = arith.index_cast %22 : i32 to index
    %24 = memref.load %arg1[%23] : memref<128xi32, #tpu.memory_space<smem>>
    %c3_i32_12 = arith.constant 3 : i32
    %c0_i32_13 = arith.constant 0 : i32
    %25 = tpu.memref_slice %arg2[%24, %c0_i32_13] : memref<50x32xf32, #tpu.memory_space<any>> -> memref<1x32xf32, #tpu.memory_space<any>>
    %c3_i32_14 = arith.constant 3 : i32
    %c0_i32_15 = arith.constant 0 : i32
    %26 = tpu.memref_slice %arg11[%c3_i32_14, %c0_i32_15] : memref<64x32xf32, #tpu.memory_space<vmem>> -> memref<1x32xf32, #tpu.memory_space<vmem>>
    %27 = tpu.memref_slice %arg12[%c3_i32_12] : memref<8x!tpu.dma_semaphore, #tpu.memory_space<semaphore_mem>> -> memref<1x!tpu.dma_semaphore, #tpu.memory_space<semaphore_mem>>
    %28 = tpu.memref_squeeze %27 : memref<1x!tpu.dma_semaphore, #tpu.memory_space<semaphore_mem>> -> memref<!tpu.dma_semaphore, #tpu.memory_space<semaphore_mem>>
    tpu.enqueue_dma source(%25 : memref<1x32xf32, #tpu.memory_space<any>>) target(%26 : memref<1x32xf32, #tpu.memory_space<vmem>>) target_semaphore(%28 : memref<!tpu.dma_semaphore, #tpu.memory_space<semaphore_mem>>)
    %c4_i32 = arith.constant 4 : i32
    %29 = arith.addi %0, %c4_i32 : i32
    %30 = arith.index_cast %29 : i32 to index
    %31 = memref.load %arg1[%30] : memref<128xi32, #tpu.memory_space<smem>>
    %c4_i32_16 = arith.constant 4 : i32
    %c0_i32_17 = arith.constant 0 : i32
    %32 = tpu.memref_slice %arg2[%31, %c0_i32_17] : memref<50x32xf32, #tpu.memory_space<any>> -> memref<1x32xf32, #tpu.memory_space<any>>
    %c4_i32_18 = arith.constant 4 : i32
    %c0_i32_19 = arith.constant 0 : i32
    %33 = tpu.memref_slice %arg11[%c4_i32_18, %c0_i32_19] : memref<64x32xf32, #tpu.memory_space<vmem>> -> memref<1x32xf32, #tpu.memory_space<vmem>>
    %34 = tpu.memref_slice %arg12[%c4_i32_16] : memref<8x!tpu.dma_semaphore, #tpu.memory_space<semaphore_mem>> -> memref<1x!tpu.dma_semaphore, #tpu.memory_space<semaphore_mem>>
    %35 = tpu.memref_squeeze %34 : memref<1x!tpu.dma_semaphore, #tpu.memory_space<semaphore_mem>> -> memref<!tpu.dma_semaphore, #tpu.memory_space<semaphore_mem>>
    tpu.enqueue_dma source(%32 : memref<1x32xf32, #tpu.memory_space<any>>) target(%33 : memref<1x32xf32, #tpu.memory_space<vmem>>) target_semaphore(%35 : memref<!tpu.dma_semaphore, #tpu.memory_space<semaphore_mem>>)
    %c5_i32 = arith.constant 5 : i32
    %36 = arith.addi %0, %c5_i32 : i32
    %37 = arith.index_cast %36 : i32 to index
    %38 = memref.load %arg1[%37] : memref<128xi32, #tpu.memory_space<smem>>
    %c5_i32_20 = arith.constant 5 : i32
    %c0_i32_21 = arith.constant 0 : i32
    %39 = tpu.memref_slice %arg2[%38, %c0_i32_21] : memref<50x32xf32, #tpu.memory_space<any>> -> memref<1x32xf32, #tpu.memory_space<any>>
    %c5_i32_22 = arith.constant 5 : i32
    %c0_i32_23 = arith.constant 0 : i32
    %40 = tpu.memref_slice %arg11[%c5_i32_22, %c0_i32_23] : memref<64x32xf32, #tpu.memory_space<vmem>> -> memref<1x32xf32, #tpu.memory_space<vmem>>
    %41 = tpu.memref_slice %arg12[%c5_i32_20] : memref<8x!tpu.dma_semaphore, #tpu.memory_space<semaphore_mem>> -> memref<1x!tpu.dma_semaphore, #tpu.memory_space<semaphore_mem>>
    %42 = tpu.memref_squeeze %41 : memref<1x!tpu.dma_semaphore, #tpu.memory_space<semaphore_mem>> -> memref<!tpu.dma_semaphore, #tpu.memory_space<semaphore_mem>>
    tpu.enqueue_dma source(%39 : memref<1x32xf32, #tpu.memory_space<any>>) target(%40 : memref<1x32xf32, #tpu.memory_space<vmem>>) target_semaphore(%42 : memref<!tpu.dma_semaphore, #tpu.memory_space<semaphore_mem>>)
    %c6_i32 = arith.constant 6 : i32
    %43 = arith.addi %0, %c6_i32 : i32
    %44 = arith.index_cast %43 : i32 to index
    %45 = memref.load %arg1[%44] : memref<128xi32, #tpu.memory_space<smem>>
    %c6_i32_24 = arith.constant 6 : i32
    %c0_i32_25 = arith.constant 0 : i32
    %46 = tpu.memref_slice %arg2[%45, %c0_i32_25] : memref<50x32xf32, #tpu.memory_space<any>> -> memref<1x32xf32, #tpu.memory_space<any>>
    %c6_i32_26 = arith.constant 6 : i32
    %c0_i32_27 = arith.constant 0 : i32
    %47 = tpu.memref_slice %arg11[%c6_i32_26, %c0_i32_27] : memref<64x32xf32, #tpu.memory_space<vmem>> -> memref<1x32xf32, #tpu.memory_space<vmem>>
    %48 = tpu.memref_slice %arg12[%c6_i32_24] : memref<8x!tpu.dma_semaphore, #tpu.memory_space<semaphore_mem>> -> memref<1x!tpu.dma_semaphore, #tpu.memory_space<semaphore_mem>>
    %49 = tpu.memref_squeeze %48 : memref<1x!tpu.dma_semaphore, #tpu.memory_space<semaphore_mem>> -> memref<!tpu.dma_semaphore, #tpu.memory_space<semaphore_mem>>
    tpu.enqueue_dma source(%46 : memref<1x32xf32, #tpu.memory_space<any>>) target(%47 : memref<1x32xf32, #tpu.memory_space<vmem>>) target_semaphore(%49 : memref<!tpu.dma_semaphore, #tpu.memory_space<semaphore_mem>>)
    %c7_i32 = arith.constant 7 : i32
    %50 = arith.addi %0, %c7_i32 : i32
    %51 = arith.index_cast %50 : i32 to index
    %52 = memref.load %arg1[%51] : memref<128xi32, #tpu.memory_space<smem>>
    %c7_i32_28 = arith.constant 7 : i32
    %c0_i32_29 = arith.constant 0 : i32
    %53 = tpu.memref_slice %arg2[%52, %c0_i32_29] : memref<50x32xf32, #tpu.memory_space<any>> -> memref<1x32xf32, #tpu.memory_space<any>>
    %c7_i32_30 = arith.constant 7 : i32
    %c0_i32_31 = arith.constant 0 : i32
    %54 = tpu.memref_slice %arg11[%c7_i32_30, %c0_i32_31] : memref<64x32xf32, #tpu.memory_space<vmem>> -> memref<1x32xf32, #tpu.memory_space<vmem>>
    %55 = tpu.memref_slice %arg12[%c7_i32_28] : memref<8x!tpu.dma_semaphore, #tpu.memory_space<semaphore_mem>> -> memref<1x!tpu.dma_semaphore, #tpu.memory_space<semaphore_mem>>
    %56 = tpu.memref_squeeze %55 : memref<1x!tpu.dma_semaphore, #tpu.memory_space<semaphore_mem>> -> memref<!tpu.dma_semaphore, #tpu.memory_space<semaphore_mem>>
    tpu.enqueue_dma source(%53 : memref<1x32xf32, #tpu.memory_space<any>>) target(%54 : memref<1x32xf32, #tpu.memory_space<vmem>>) target_semaphore(%56 : memref<!tpu.dma_semaphore, #tpu.memory_space<semaphore_mem>>)
    %c0_i32_32 = arith.constant 0 : i32
    %c64_i32_33 = arith.constant 64 : i32
    %57 = arith.addi %c0_i32_32, %c64_i32_33 : i32
    %c1_i32_34 = arith.constant 1 : i32
    scf.for %arg13 = %c0_i32_32 to %57 step %c1_i32_34  : i32 {
      %c1_i32_63 = arith.constant 1 : i32
      %118 = arith.muli %arg13, %c1_i32_63 : i32
      %c0_i32_64 = arith.constant 0 : i32
      %119 = arith.addi %c0_i32_64, %118 : i32
      %c8_i32 = arith.constant 8 : i32
      %c0_i32_65 = arith.constant 0 : i32
      %120 = arith.cmpi eq, %c8_i32, %c0_i32_65 : i32
      %c1_i32_66 = arith.constant 1 : i32
      %121 = arith.select %120, %c1_i32_66, %c8_i32 : i32
      %122 = arith.remsi %119, %121 : i32
      %c0_i32_67 = arith.constant 0 : i32
      %123 = arith.cmpi ne, %122, %c0_i32_67 : i32
      %c0_i32_68 = arith.constant 0 : i32
      %124 = arith.cmpi slt, %122, %c0_i32_68 : i32
      %c0_i32_69 = arith.constant 0 : i32
      %125 = arith.cmpi slt, %121, %c0_i32_69 : i32
      %126 = arith.xori %124, %125 : i1
      %127 = arith.andi %126, %123 : i1
      %128 = arith.addi %122, %121 : i32
      %129 = arith.select %127, %128, %122 : i32
      %c0_i32_70 = arith.constant 0 : i32
      %c0_i32_71 = arith.constant 0 : i32
      %130 = tpu.memref_slice %arg2[%c0_i32_70, %c0_i32_71] : memref<50x32xf32, #tpu.memory_space<any>> -> memref<1x32xf32, #tpu.memory_space<any>>
      %c0_i32_72 = arith.constant 0 : i32
      %131 = tpu.memref_slice %arg11[%119, %c0_i32_72] : memref<64x32xf32, #tpu.memory_space<vmem>> -> memref<1x32xf32, #tpu.memory_space<vmem>>
      %132 = tpu.memref_slice %arg12[%129] : memref<8x!tpu.dma_semaphore, #tpu.memory_space<semaphore_mem>> -> memref<1x!tpu.dma_semaphore, #tpu.memory_space<semaphore_mem>>
      %133 = tpu.memref_squeeze %132 : memref<1x!tpu.dma_semaphore, #tpu.memory_space<semaphore_mem>> -> memref<!tpu.dma_semaphore, #tpu.memory_space<semaphore_mem>>
      tpu.wait_dma2 semaphore(%133 : memref<!tpu.dma_semaphore, #tpu.memory_space<semaphore_mem>>) src(%130 : memref<1x32xf32, #tpu.memory_space<any>>) dst(%131 : memref<1x32xf32, #tpu.memory_space<vmem>>)
      %c8_i32_73 = arith.constant 8 : i32
      %134 = arith.addi %119, %c8_i32_73 : i32
      %c64_i32_74 = arith.constant 64 : i32
      %135 = arith.cmpi slt, %134, %c64_i32_74 : i32
      %136 = arith.extui %135 : i1 to i32
      %c0_i32_75 = arith.constant 0 : i32
      %137 = arith.cmpi ne, %136, %c0_i32_75 : i32
      scf.if %137 {
        %c8_i32_76 = arith.constant 8 : i32
        %138 = arith.addi %119, %c8_i32_76 : i32
        %139 = arith.addi %0, %138 : i32
        %140 = arith.index_cast %139 : i32 to index
        %141 = memref.load %arg1[%140] : memref<128xi32, #tpu.memory_space<smem>>
        %c8_i32_77 = arith.constant 8 : i32
        %c0_i32_78 = arith.constant 0 : i32
        %142 = arith.cmpi eq, %c8_i32_77, %c0_i32_78 : i32
        %c1_i32_79 = arith.constant 1 : i32
        %143 = arith.select %142, %c1_i32_79, %c8_i32_77 : i32
        %144 = arith.remsi %138, %143 : i32
        %c0_i32_80 = arith.constant 0 : i32
        %145 = arith.cmpi ne, %144, %c0_i32_80 : i32
        %c0_i32_81 = arith.constant 0 : i32
        %146 = arith.cmpi slt, %144, %c0_i32_81 : i32
        %c0_i32_82 = arith.constant 0 : i32
        %147 = arith.cmpi slt, %143, %c0_i32_82 : i32
        %148 = arith.xori %146, %147 : i1
        %149 = arith.andi %148, %145 : i1
        %150 = arith.addi %144, %143 : i32
        %151 = arith.select %149, %150, %144 : i32
        %c0_i32_83 = arith.constant 0 : i32
        %152 = tpu.memref_slice %arg2[%141, %c0_i32_83] : memref<50x32xf32, #tpu.memory_space<any>> -> memref<1x32xf32, #tpu.memory_space<any>>
        %c0_i32_84 = arith.constant 0 : i32
        %153 = tpu.memref_slice %arg11[%138, %c0_i32_84] : memref<64x32xf32, #tpu.memory_space<vmem>> -> memref<1x32xf32, #tpu.memory_space<vmem>>
        %154 = tpu.memref_slice %arg12[%151] : memref<8x!tpu.dma_semaphore, #tpu.memory_space<semaphore_mem>> -> memref<1x!tpu.dma_semaphore, #tpu.memory_space<semaphore_mem>>
        %155 = tpu.memref_squeeze %154 : memref<1x!tpu.dma_semaphore, #tpu.memory_space<semaphore_mem>> -> memref<!tpu.dma_semaphore, #tpu.memory_space<semaphore_mem>>
        tpu.enqueue_dma source(%152 : memref<1x32xf32, #tpu.memory_space<any>>) target(%153 : memref<1x32xf32, #tpu.memory_space<vmem>>) target_semaphore(%155 : memref<!tpu.dma_semaphore, #tpu.memory_space<semaphore_mem>>)
      } else {
      }
    }
    %c64_i32_35 = arith.constant 64 : i32
    %c0 = arith.constant 0 : index
    %c0_36 = arith.constant 0 : index
    %58 = vector.load %arg11[%c0, %c0_36] : memref<64x32xf32, #tpu.memory_space<vmem>>, vector<64x32xf32>
    %59 = arith.truncf %58 : vector<64x32xf32> to vector<64x32xbf16>
    %c0_37 = arith.constant 0 : index
    %c0_38 = arith.constant 0 : index
    %60 = vector.load %arg3[%c0_37, %c0_38] : memref<32x96xbf16, #tpu.memory_space<vmem>>, vector<32x96xbf16>
    %cst = arith.constant dense<0.000000e+00> : vector<64x96xf32>
    %61 = tpu.matmul %59, %60, %cst {dimension_numbers = #tpu.dot_dimension_numbers<[1], [0], [0], [1], [0, 0, 1, 1], [], []>} : vector<64x32xbf16>, vector<32x96xbf16>, vector<64x96xf32> -> vector<64x96xf32>
    %c0_39 = arith.constant 0 : index
    %c0_40 = arith.constant 0 : index
    %62 = vector.load %arg4[%c0_39, %c0_40] : memref<5x96xf32, #tpu.memory_space<vmem>>, vector<1x96xf32>
    %63 = vector.shape_cast %62 : vector<1x96xf32> to vector<96xf32>
    %64 = vector.shape_cast %63 : vector<96xf32> to vector<1x96xf32>
    %65 = vector.broadcast %64 : vector<1x96xf32> to vector<64x96xf32>
    %66 = arith.mulf %61, %65 : vector<64x96xf32>
    %cst_41 = arith.constant 0.000000e+00 : f32
    %67 = vector.broadcast %cst_41 : f32 to vector<4x96xf32>
    %68 = tpu.concatenate %61, %67 in 0 : vector<64x96xf32>, vector<4x96xf32> -> vector<68x96xf32>
    %69 = vector.extract_strided_slice %68 {offsets = [1, 0], sizes = [64, 96], strides = [1, 1]} : vector<68x96xf32> to vector<64x96xf32>
    %c1 = arith.constant 1 : index
    %c0_42 = arith.constant 0 : index
    %70 = vector.load %arg4[%c1, %c0_42] : memref<5x96xf32, #tpu.memory_space<vmem>>, vector<1x96xf32>
    %71 = vector.shape_cast %70 : vector<1x96xf32> to vector<96xf32>
    %72 = vector.shape_cast %71 : vector<96xf32> to vector<1x96xf32>
    %73 = vector.broadcast %72 : vector<1x96xf32> to vector<64x96xf32>
    %74 = arith.mulf %69, %73 : vector<64x96xf32>
    %75 = arith.addf %66, %74 : vector<64x96xf32>
    %76 = vector.extract_strided_slice %68 {offsets = [2, 0], sizes = [64, 96], strides = [1, 1]} : vector<68x96xf32> to vector<64x96xf32>
    %c2 = arith.constant 2 : index
    %c0_43 = arith.constant 0 : index
    %77 = vector.load %arg4[%c2, %c0_43] : memref<5x96xf32, #tpu.memory_space<vmem>>, vector<1x96xf32>
    %78 = vector.shape_cast %77 : vector<1x96xf32> to vector<96xf32>
    %79 = vector.shape_cast %78 : vector<96xf32> to vector<1x96xf32>
    %80 = vector.broadcast %79 : vector<1x96xf32> to vector<64x96xf32>
    %81 = arith.mulf %76, %80 : vector<64x96xf32>
    %82 = arith.addf %75, %81 : vector<64x96xf32>
    %83 = vector.extract_strided_slice %68 {offsets = [3, 0], sizes = [64, 96], strides = [1, 1]} : vector<68x96xf32> to vector<64x96xf32>
    %c3 = arith.constant 3 : index
    %c0_44 = arith.constant 0 : index
    %84 = vector.load %arg4[%c3, %c0_44] : memref<5x96xf32, #tpu.memory_space<vmem>>, vector<1x96xf32>
    %85 = vector.shape_cast %84 : vector<1x96xf32> to vector<96xf32>
    %86 = vector.shape_cast %85 : vector<96xf32> to vector<1x96xf32>
    %87 = vector.broadcast %86 : vector<1x96xf32> to vector<64x96xf32>
    %88 = arith.mulf %83, %87 : vector<64x96xf32>
    %89 = arith.addf %82, %88 : vector<64x96xf32>
    %90 = vector.extract_strided_slice %68 {offsets = [4, 0], sizes = [64, 96], strides = [1, 1]} : vector<68x96xf32> to vector<64x96xf32>
    %c4 = arith.constant 4 : index
    %c0_45 = arith.constant 0 : index
    %91 = vector.load %arg4[%c4, %c0_45] : memref<5x96xf32, #tpu.memory_space<vmem>>, vector<1x96xf32>
    %92 = vector.shape_cast %91 : vector<1x96xf32> to vector<96xf32>
    %93 = vector.shape_cast %92 : vector<96xf32> to vector<1x96xf32>
    %94 = vector.broadcast %93 : vector<1x96xf32> to vector<64x96xf32>
    %95 = arith.mulf %90, %94 : vector<64x96xf32>
    %96 = arith.addf %89, %95 : vector<64x96xf32>
    %c0_46 = arith.constant 0 : index
    %c0_47 = arith.constant 0 : index
    %97 = vector.load %arg5[%c0_46, %c0_47] : memref<96x24xf32, #tpu.memory_space<vmem>>, vector<96x24xf32>
    %cst_48 = arith.constant dense<0.000000e+00> : vector<64x24xf32>
    %98 = tpu.matmul %96, %97, %cst_48 {dimension_numbers = #tpu.dot_dimension_numbers<[1], [0], [0], [1], [0, 0, 1, 1], [], []>} : vector<64x96xf32>, vector<96x24xf32>, vector<64x24xf32> -> vector<64x24xf32>
    %c0_49 = arith.constant 0 : index
    %c0_50 = arith.constant 0 : index
    %99 = vector.load %arg6[%c0_49, %c0_50] : memref<1x24xf32, #tpu.memory_space<vmem>>, vector<1x24xf32>
    %100 = vector.broadcast %99 : vector<1x24xf32> to vector<64x24xf32>
    %101 = arith.addf %98, %100 : vector<64x24xf32>
    %cst_51 = arith.constant 0.000000e+00 : f32
    %102 = vector.broadcast %cst_51 : f32 to vector<64x24xf32>
    %103 = arith.maximumf %101, %102 : vector<64x24xf32>
    %104 = vector.shape_cast %103 : vector<64x24xf32> to vector<4x16x24xf32>
    %c0_52 = arith.constant 0 : index
    %c0_53 = arith.constant 0 : index
    %105 = vector.load %arg7[%c0_52, %c0_53] : memref<16x24xf32, #tpu.memory_space<vmem>>, vector<16x24xf32>
    %106 = vector.shape_cast %105 : vector<16x24xf32> to vector<1x16x24xf32>
    %107 = vector.broadcast %106 : vector<1x16x24xf32> to vector<4x16x24xf32>
    %108 = arith.mulf %104, %107 : vector<4x16x24xf32>
    %cst_54 = arith.constant dense<0xFF800000> : vector<4x24xf32>
    %109 = vector.multi_reduction <maximumf>, %108, %cst_54 [1] : vector<4x16x24xf32> to vector<4x24xf32>
    %c0_55 = arith.constant 0 : index
    %c0_56 = arith.constant 0 : index
    %110 = vector.load %arg8[%c0_55, %c0_56] : memref<24x128xf32, #tpu.memory_space<vmem>>, vector<24x128xf32>
    %cst_57 = arith.constant dense<0.000000e+00> : vector<4x128xf32>
    %111 = tpu.matmul %109, %110, %cst_57 {dimension_numbers = #tpu.dot_dimension_numbers<[1], [0], [0], [1], [0, 0, 1, 1], [], []>} : vector<4x24xf32>, vector<24x128xf32>, vector<4x128xf32> -> vector<4x128xf32>
    %c0_58 = arith.constant 0 : index
    %c0_59 = arith.constant 0 : index
    %112 = vector.load %arg9[%c0_58, %c0_59] : memref<1x128xf32, #tpu.memory_space<vmem>>, vector<1x128xf32>
    %113 = vector.broadcast %112 : vector<1x128xf32> to vector<4x128xf32>
    %114 = arith.addf %111, %113 : vector<4x128xf32>
    %c0_60 = arith.constant 0 : index
    %c0_61 = arith.constant 0 : index
    %c0_62 = arith.constant 0 : index
    %115 = vector.load %arg10[%c0_60, %c0_61, %c0_62] : memref<1x4x128xf32, #tpu.memory_space<vmem>>, vector<1x4x128xf32>
    %116 = vector.shape_cast %115 : vector<1x4x128xf32> to vector<4x128xf32>
    %117 = vector.shape_cast %114 : vector<4x128xf32> to vector<1x4x128xf32>
    tpu.vector_store %arg10[%c0_60, %c0_61, %c0_62], %117 {strides = array<i32>} : memref<1x4x128xf32, #tpu.memory_space<vmem>>, vector<1x4x128xf32>,
    return
  }
  func.func @transform_1(%arg0: i32, %arg1: memref<128xi32, #tpu.memory_space<smem>>) -> (i32, i32) {
    %c0_i32 = arith.constant 0 : i32
    %c0_i32_0 = arith.constant 0 : i32
    %c0_i32_1 = arith.constant 0 : i32
    return %c0_i32, %c0_i32_0 : i32, i32
  }
  func.func @transform_2(%arg0: i32, %arg1: memref<128xi32, #tpu.memory_space<smem>>) -> (i32, i32) {
    %c0_i32 = arith.constant 0 : i32
    %c0_i32_0 = arith.constant 0 : i32
    %c0_i32_1 = arith.constant 0 : i32
    return %c0_i32, %c0_i32_0 : i32, i32
  }
  func.func @transform_3(%arg0: i32, %arg1: memref<128xi32, #tpu.memory_space<smem>>) -> (i32, i32) {
    %c0_i32 = arith.constant 0 : i32
    %c0_i32_0 = arith.constant 0 : i32
    %c0_i32_1 = arith.constant 0 : i32
    return %c0_i32, %c0_i32_0 : i32, i32
  }
  func.func @transform_4(%arg0: i32, %arg1: memref<128xi32, #tpu.memory_space<smem>>) -> (i32, i32) {
    %c0_i32 = arith.constant 0 : i32
    %c0_i32_0 = arith.constant 0 : i32
    %c0_i32_1 = arith.constant 0 : i32
    return %c0_i32, %c0_i32_0 : i32, i32
  }
  func.func @transform_5(%arg0: i32, %arg1: memref<128xi32, #tpu.memory_space<smem>>) -> (i32, i32) {
    %c0_i32 = arith.constant 0 : i32
    %c0_i32_0 = arith.constant 0 : i32
    %c0_i32_1 = arith.constant 0 : i32
    return %c0_i32, %c0_i32_0 : i32, i32
  }
  func.func @transform_6(%arg0: i32, %arg1: memref<128xi32, #tpu.memory_space<smem>>) -> (i32, i32) {
    %c0_i32 = arith.constant 0 : i32
    %c0_i32_0 = arith.constant 0 : i32
    %c0_i32_1 = arith.constant 0 : i32
    return %c0_i32, %c0_i32_0 : i32, i32
  }
  func.func @transform_7(%arg0: i32, %arg1: memref<128xi32, #tpu.memory_space<smem>>) -> (i32, i32) {
    %c0_i32 = arith.constant 0 : i32
    %c0_i32_0 = arith.constant 0 : i32
    %c0_i32_1 = arith.constant 0 : i32
    return %c0_i32, %c0_i32_0 : i32, i32
  }
  func.func @transform_8(%arg0: i32, %arg1: memref<128xi32, #tpu.memory_space<smem>>) -> (i32, i32, i32) {
    %c0_i32 = arith.constant 0 : i32
    %c0_i32_0 = arith.constant 0 : i32
    %c0_i32_1 = arith.constant 0 : i32
    return %arg0, %c0_i32, %c0_i32_0 : i32, i32, i32
  }
}

</mosaic_0001>

<llo_original>
// kernel: tpu_custom_call.1
$region0: #{tpu_custom_call.1}
  #allocation0 [shape = 'u32[]', space=smem, size = 0x4, offset = 0x4, fixed_abs, tag = 'smem constant byte address 0x4 - core index']
  #allocation1 [shape = 'u32[72,128]{1,0:T(1,128)}', space=vmem, size = 0x9000, scoped, tag = 'internal scratch']
  #allocation2 [shape = 'f32[64,32]{1,0:T(8,128)}', space=vmem, size = 0x8000, scoped, tag = 'scratch operand']
  #allocation3 [shape = 's32[8]{0}', space=sflag, size = 0x20, scoped, tag = 'scratch operand']
  #allocation4 [shape = 's32[1]{0}', space=sflag, size = 0x4, scoped, tag = 'scoped memory for tpu_custom_call.1']
  #allocation5 [shape = 'u8[512]{0}', space=smem, size = 0x200, scoped, tag = 'prefetched SMEM operand 0']
  #allocation8 [shape = 's32[]', space=sflag, size = 0x4, offset = 0, fixed_abs, tag = 'sflag constant byte address 0x0 - dummy sync flag']
  #allocation9 [shape = 's32[]', space=sflag, size = 0x4, offset = 0, fixed_abs, tag = 'sflag constant byte address 0x0 - dummy sync flag']
  #allocation10 [shape = 's32[]', space=sflag, size = 0x4, offset = 0, fixed_abs, tag = 'sflag constant byte address 0x0 - dummy sync flag']
  #allocation11 [shape = 's32[]', space=sflag, size = 0x4, offset = 0, fixed_abs, tag = 'sflag constant byte address 0x0 - dummy sync flag']
  #allocation12 [shape = 's32[]', space=sflag, size = 0x4, offset = 0, fixed_abs, tag = 'sflag constant byte address 0x0 - dummy sync flag']
  #allocation13 [shape = 's32[]', space=sflag, size = 0x4, offset = 0, fixed_abs, tag = 'sflag constant byte address 0x0 - dummy sync flag']
  #allocation14 [shape = 's32[]', space=sflag, size = 0x4, offset = 0, fixed_abs, tag = 'sflag constant byte address 0x0 - dummy sync flag']
  #allocation15 [shape = 's32[]', space=sflag, size = 0x4, offset = 0, fixed_abs, tag = 'sflag constant byte address 0x0 - dummy sync flag']
  #allocation16 [shape = 's32[]', space=sflag, size = 0x4, offset = 0, fixed_abs, tag = 'sflag constant byte address 0x0 - dummy sync flag']
  %s0 = inlined_call_operand.vmem [shape: s32[128], index: 0, kind: input, shape index: {}]
  %s1 = inlined_call_operand.vmem [shape: f32[50,32], index: 1, kind: input, shape index: {}]
  %s2 = inlined_call_operand.vmem [shape: bf16[32,96], index: 2, kind: input, shape index: {}]
  %s3 = inlined_call_operand.vmem [shape: f32[5,96], index: 3, kind: input, shape index: {}]
  %s4 = inlined_call_operand.vmem [shape: f32[96,24], index: 4, kind: input, shape index: {}]
  %s5 = inlined_call_operand.vmem [shape: f32[1,24], index: 5, kind: input, shape index: {}]
  %s6 = inlined_call_operand.vmem [shape: f32[16,24], index: 6, kind: input, shape index: {}]
  %s7 = inlined_call_operand.vmem [shape: f32[24,128], index: 7, kind: input, shape index: {}]
  %s8 = inlined_call_operand.vmem [shape: f32[1,128], index: 8, kind: input, shape index: {}]
  %s9 = inlined_call_operand.hbm [shape: f32[2,4,128], index: 9, kind: output, shape index: {}]
  %s10 = sld [smem:[#allocation0]]
  $region342: #{tpu_custom_call.1} parent=0
    _
  %s12 = ssub.s32 1, %s10
  %s13 = scalar_select 0, %s12, %s10
  %s15 = sshll.u32 %s0, 4
  %s16 = int_to_ptr.vmem [resolvable:$true] %s15
  %18 = dma.vmem_to_smem %s16, 16, [#allocation5], [#allocation4]
  %20 = dma.done [#allocation4], 16
  %21 = sfence
  $region1: #{tpu_custom_call.1} parent=0
    #allocation6 [shape = 'u8[4096]{0}', space=vmem, size = 0x1000, scoped, tag = 'output window, operand 0']
    #allocation7 [shape = 's32[2]{0}', space=sflag, size = 0x8, scoped, tag = 'scoped memory for tpu_custom_call.1']
    %22 = vsyncpa [#allocation7], 0
    %s23 = scalar_lea.sflag [#allocation7], 1
    %24 = vsyncpa %s23, 0
    loop: start=0, step=1, limit=4
    $region2: #{tpu_custom_call.1} parent=1 // loop_pre_header
      _
    $region3: #{tpu_custom_call.1} parent=1 // loop_header
      %s26 = sphi 0, %s30
      %p27 = scmp.ge.s32.totalorder %s26, 4
      %s34 = sphi 0, %s34
      %s36 = sphi 0, %s34
      %s37 = sphi 0, %s36
      %s51 = sphi 0, %s37
      %s55 = sphi 0, %s55
      %s57 = sphi 0, %s55
      %s58 = sphi 0, %s57
      %s72 = sphi 0, %s58
      %s76 = sphi 0, %s76
      %s78 = sphi 0, %s76
      %s79 = sphi 0, %s78
      %s93 = sphi 0, %s79
      %s97 = sphi 0, %s97
      %s99 = sphi 0, %s97
      %s100 = sphi 0, %s99
      %s114 = sphi 0, %s100
      %s118 = sphi 0, %s118
      %s120 = sphi 0, %s118
      %s121 = sphi 0, %s120
      %s135 = sphi 0, %s121
      %s139 = sphi 0, %s139
      %s141 = sphi 0, %s139
      %s142 = sphi 0, %s141
      %s156 = sphi 0, %s142
      %s160 = sphi 0, %s160
      %s162 = sphi 0, %s160
      %s163 = sphi 0, %s162
      %s177 = sphi 0, %s163
      %s183 = sphi 0, %s185
      %s186 = sphi 0, %s183
      %s187 = sphi 0, %s186
      %s203 = sphi 0, %s187
    $region4: #{tpu_custom_call.1} parent=1 // loop_header_branch
      %29 = sbr.rel (%p27) target = $region8
    $region5: #{tpu_custom_call.1} parent=1 // loop_body
      %s31 = ssub.s32 %s26, 1
      %s32 = ssub.s32 %s26, 2
      %s33 = sadd.s32 %s26, 1
      %s35 = sadd.s32 %s34, 1
      %p38 = scmp.eq.s32.totalorder %s26, 1
      %p39 = scmp.ne.s32.totalorder %s34, %s36
      %p40 = scmp.eq.s32.totalorder %s26, 0
      %p41 = por %p39, %p40
      %p42 = scmp.ne.s32.totalorder %s34, %s36
      %p43 = scmp.eq.s32.totalorder %s31, 1
      %p44 = por %p42, %p43
      %p45 = scmp.ne.s32.totalorder %s36, %s37
      %p46 = scmp.eq.s32.totalorder %s31, 0
      %p47 = por %p45, %p46
      %p48 = scmp.ne.s32.totalorder %s36, %s37
      %p49 = scmp.eq.s32.totalorder %s32, 1
      %p50 = por %p48, %p49
      %p52 = scmp.ne.s32.totalorder %s37, %s51
      %p53 = scmp.eq.s32.totalorder %s32, 0
      %p54 = por %p52, %p53
      %s56 = sadd.s32 %s55, 1
      %p59 = scmp.eq.s32.totalorder %s26, 1
      %p60 = scmp.ne.s32.totalorder %s55, %s57
      %p61 = scmp.eq.s32.totalorder %s26, 0
      %p62 = por %p60, %p61
      %p63 = scmp.ne.s32.totalorder %s55, %s57
      %p64 = scmp.eq.s32.totalorder %s31, 1
      %p65 = por %p63, %p64
      %p66 = scmp.ne.s32.totalorder %s57, %s58
      %p67 = scmp.eq.s32.totalorder %s31, 0
      %p68 = por %p66, %p67
      %p69 = scmp.ne.s32.totalorder %s57, %s58
      %p70 = scmp.eq.s32.totalorder %s32, 1
      %p71 = por %p69, %p70
      %p73 = scmp.ne.s32.totalorder %s58, %s72
      %p74 = scmp.eq.s32.totalorder %s32, 0
      %p75 = por %p73, %p74
      %s77 = sadd.s32 %s76, 1
      %p80 = scmp.eq.s32.totalorder %s26, 1
      %p81 = scmp.ne.s32.totalorder %s76, %s78
      %p82 = scmp.eq.s32.totalorder %s26, 0
      %p83 = por %p81, %p82
      %p84 = scmp.ne.s32.totalorder %s76, %s78
      %p85 = scmp.eq.s32.totalorder %s31, 1
      %p86 = por %p84, %p85
      %p87 = scmp.ne.s32.totalorder %s78, %s79
      %p88 = scmp.eq.s32.totalorder %s31, 0
      %p89 = por %p87, %p88
      %p90 = scmp.ne.s32.totalorder %s78, %s79
      %p91 = scmp.eq.s32.totalorder %s32, 1
      %p92 = por %p90, %p91
      %p94 = scmp.ne.s32.totalorder %s79, %s93
      %p95 = scmp.eq.s32.totalorder %s32, 0
      %p96 = por %p94, %p95
      %s98 = sadd.s32 %s97, 1
      %p101 = scmp.eq.s32.totalorder %s26, 1
      %p102 = scmp.ne.s32.totalorder %s97, %s99
      %p103 = scmp.eq.s32.totalorder %s26, 0
      %p104 = por %p102, %p103
      %p105 = scmp.ne.s32.totalorder %s97, %s99
      %p106 = scmp.eq.s32.totalorder %s31, 1
      %p107 = por %p105, %p106
      %p108 = scmp.ne.s32.totalorder %s99, %s100
      %p109 = scmp.eq.s32.totalorder %s31, 0
      %p110 = por %p108, %p109
      %p111 = scmp.ne.s32.totalorder %s99, %s100
      %p112 = scmp.eq.s32.totalorder %s32, 1
      %p113 = por %p111, %p112
      %p115 = scmp.ne.s32.totalorder %s100, %s114
      %p116 = scmp.eq.s32.totalorder %s32, 0
      %p117 = por %p115, %p116
      %s119 = sadd.s32 %s118, 1
      %p122 = scmp.eq.s32.totalorder %s26, 1
      %p123 = scmp.ne.s32.totalorder %s118, %s120
      %p124 = scmp.eq.s32.totalorder %s26, 0
      %p125 = por %p123, %p124
      %p126 = scmp.ne.s32.totalorder %s118, %s120
      %p127 = scmp.eq.s32.totalorder %s31, 1
      %p128 = por %p126, %p127
      %p129 = scmp.ne.s32.totalorder %s120, %s121
      %p130 = scmp.eq.s32.totalorder %s31, 0
      %p131 = por %p129, %p130
      %p132 = scmp.ne.s32.totalorder %s120, %s121
      %p133 = scmp.eq.s32.totalorder %s32, 1
      %p134 = por %p132, %p133
      %p136 = scmp.ne.s32.totalorder %s121, %s135
      %p137 = scmp.eq.s32.totalorder %s32, 0
      %p138 = por %p136, %p137
      %s140 = sadd.s32 %s139, 1
      %p143 = scmp.eq.s32.totalorder %s26, 1
      %p144 = scmp.ne.s32.totalorder %s139, %s141
      %p145 = scmp.eq.s32.totalorder %s26, 0
      %p146 = por %p144, %p145
      %p147 = scmp.ne.s32.totalorder %s139, %s141
      %p148 = scmp.eq.s32.totalorder %s31, 1
      %p149 = por %p147, %p148
      %p150 = scmp.ne.s32.totalorder %s141, %s142
      %p151 = scmp.eq.s32.totalorder %s31, 0
      %p152 = por %p150, %p151
      %p153 = scmp.ne.s32.totalorder %s141, %s142
      %p154 = scmp.eq.s32.totalorder %s32, 1
      %p155 = por %p153, %p154
      %p157 = scmp.ne.s32.totalorder %s142, %s156
      %p158 = scmp.eq.s32.totalorder %s32, 0
      %p159 = por %p157, %p158
      %s161 = sadd.s32 %s160, 1
      %p164 = scmp.eq.s32.totalorder %s26, 1
      %p165 = scmp.ne.s32.totalorder %s160, %s162
      %p166 = scmp.eq.s32.totalorder %s26, 0
      %p167 = por %p165, %p166
      %p168 = scmp.ne.s32.totalorder %s160, %s162
      %p169 = scmp.eq.s32.totalorder %s31, 1
      %p170 = por %p168, %p169
      %p171 = scmp.ne.s32.totalorder %s162, %s163
      %p172 = scmp.eq.s32.totalorder %s31, 0
      %p173 = por %p171, %p172
      %p174 = scmp.ne.s32.totalorder %s162, %s163
      %p175 = scmp.eq.s32.totalorder %s32, 1
      %p176 = por %p174, %p175
      %p178 = scmp.ne.s32.totalorder %s163, %s177
      %p179 = scmp.eq.s32.totalorder %s32, 0
      %p180 = por %p178, %p179
      %s181 = ssub.s32 %s26, %s33
      %p182 = scmp.eq.s32.totalorder %s181, 0
      %s184 = sadd.s32 %s183, 1
      %s185 = scalar_select %p182, %s183, %s184
      %p188 = pneg %p182
      %p189 = scmp.eq.s32.totalorder %s26, 1
      %p190 = por %p188, %p189
      %p191 = scmp.ne.s32.totalorder %s183, %s186
      %p192 = scmp.eq.s32.totalorder %s26, 0
      %p193 = por %p191, %p192
      %p194 = scmp.ne.s32.totalorder %s183, %s186
      %p195 = scmp.eq.s32.totalorder %s31, 1
      %p196 = por %p194, %p195
      %p197 = scmp.ne.s32.totalorder %s186, %s187
      %p198 = scmp.eq.s32.totalorder %s31, 0
      %p199 = por %p197, %p198
      %p200 = scmp.ne.s32.totalorder %s186, %s187
      %p201 = scmp.eq.s32.totalorder %s32, 1
      %p202 = por %p200, %p201
      %p204 = scmp.ne.s32.totalorder %s187, %s203
      %p205 = scmp.eq.s32.totalorder %s32, 0
      %p206 = por %p204, %p205
      %p207 = scmp.le.s32.totalorder 1, %s26
      %p208 = scmp.lt.s32.totalorder %s26, 3
      %p209 = pnand %p207, %p208
      %p210 = pneg %p209
      // Predicated region
      $region9: #{tpu_custom_call.1} parent=5 // pred_check
        _
      $region10: #{tpu_custom_call.1} parent=5 // pred_check_branch
        %212 = sbr.rel (%p209) target = $region12
      $region11: #{tpu_custom_call.1} parent=5 // pred_region
        %s213 = ssub.s32 %s26, 1
        // Predicated region
        $region13: #{tpu_custom_call.1} parent=11 // pred_check
          %p214 = pneg %p47
        $region14: #{tpu_custom_call.1} parent=11 // pred_check_branch
          %216 = sbr.rel (%p214) target = $region16
        $region15: #{tpu_custom_call.1} parent=11 // pred_region
          _
        $region16: #{tpu_custom_call.1} parent=11 // pred_fallthru
          _
        // Predicated region
        $region17: #{tpu_custom_call.1} parent=11 // pred_check
          %p217 = pneg %p68
        $region18: #{tpu_custom_call.1} parent=11 // pred_check_branch
          %219 = sbr.rel (%p217) target = $region20
        $region19: #{tpu_custom_call.1} parent=11 // pred_region
          _
        $region20: #{tpu_custom_call.1} parent=11 // pred_fallthru
          _
        // Predicated region
        $region21: #{tpu_custom_call.1} parent=11 // pred_check
          %p220 = pneg %p89
        $region22: #{tpu_custom_call.1} parent=11 // pred_check_branch
          %222 = sbr.rel (%p220) target = $region24
        $region23: #{tpu_custom_call.1} parent=11 // pred_region
          _
        $region24: #{tpu_custom_call.1} parent=11 // pred_fallthru
          _
        // Predicated region
        $region25: #{tpu_custom_call.1} parent=11 // pred_check
          %p223 = pneg %p110
        $region26: #{tpu_custom_call.1} parent=11 // pred_check_branch
          %225 = sbr.rel (%p223) target = $region28
        $region27: #{tpu_custom_call.1} parent=11 // pred_region
          _
        $region28: #{tpu_custom_call.1} parent=11 // pred_fallthru
          _
        // Predicated region
        $region29: #{tpu_custom_call.1} parent=11 // pred_check
          %p226 = pneg %p131
        $region30: #{tpu_custom_call.1} parent=11 // pred_check_branch
          %228 = sbr.rel (%p226) target = $region32
        $region31: #{tpu_custom_call.1} parent=11 // pred_region
          _
        $region32: #{tpu_custom_call.1} parent=11 // pred_fallthru
          _
        // Predicated region
        $region33: #{tpu_custom_call.1} parent=11 // pred_check
          %p229 = pneg %p152
        $region34: #{tpu_custom_call.1} parent=11 // pred_check_branch
          %231 = sbr.rel (%p229) target = $region36
        $region35: #{tpu_custom_call.1} parent=11 // pred_region
          _
        $region36: #{tpu_custom_call.1} parent=11 // pred_fallthru
          _
        // Predicated region
        $region37: #{tpu_custom_call.1} parent=11 // pred_check
          %p232 = pneg %p173
        $region38: #{tpu_custom_call.1} parent=11 // pred_check_branch
          %234 = sbr.rel (%p232) target = $region40
        $region39: #{tpu_custom_call.1} parent=11 // pred_region
          _
        $region40: #{tpu_custom_call.1} parent=11 // pred_fallthru
          _
      $region12: #{tpu_custom_call.1} parent=5 // pred_fallthru
        _
      %p235 = scmp.lt.s32.totalorder %s26, 2
      // Predicated region
      $region41: #{tpu_custom_call.1} parent=5 // pred_check
        %p236 = pneg %p235
      $region42: #{tpu_custom_call.1} parent=5 // pred_check_branch
        %238 = sbr.rel (%p236) target = $region44
      $region43: #{tpu_custom_call.1} parent=5 // pred_region
        _
      $region44: #{tpu_custom_call.1} parent=5 // pred_fallthru
        _
      %p239 = scmp.le.s32.totalorder 1, %s26
      %p240 = scmp.lt.s32.totalorder %s26, 3
      %p241 = pnand %p239, %p240
      %p242 = pneg %p241
      // Predicated region
      $region45: #{tpu_custom_call.1} parent=5 // pred_check
        _
      $region46: #{tpu_custom_call.1} parent=5 // pred_check_branch
        %244 = sbr.rel (%p241) target = $region48
      $region47: #{tpu_custom_call.1} parent=5 // pred_region
        %s245 = ssub.s32 %s26, 1
        %p246 = pneg %p47
        %p247 = pneg %p44
        %p248 = pneg %p68
        %p249 = pneg %p65
        %p250 = pneg %p89
        %p251 = pneg %p86
        %p252 = pneg %p110
        %p253 = pneg %p107
        %p254 = pneg %p131
        %p255 = pneg %p128
        %p256 = pneg %p152
        %p257 = pneg %p149
        %p258 = pneg %p173
        %p259 = pneg %p170
        %p260 = pneg %p199
        %p261 = pneg %p196
        %s262 = sand.u32 %s186, 1
        %s263 = scalar_lea.sflag [#allocation7], %s262
        %s264 = sand.u32 %s186, 1
        %s265 = smul.addr %s264, 4
        %s266 = scalar_lea.vmem [#allocation6], %s265
        %s268 = smul.u32 %s31, 64
        %s269 = sld [smem:[#allocation5 + %s268]]
        %s270 = scalar_lea.vmem %s1, %s269
        // Predicated region
        $region49: #{tpu_custom_call.1} parent=47 // pred_check
          _
        $region50: #{tpu_custom_call.1} parent=47 // pred_check_branch
          %272 = sbr.rel target = $region52
        $region51: #{tpu_custom_call.1} parent=47 // pred_region
          // Predicated region
          $region64: #{tpu_custom_call.1} parent=51 // pred_check
            _
          $region65: #{tpu_custom_call.1} parent=51 // pred_check_branch
            %288 = sbr.rel (0) target = $region67
          $region66: #{tpu_custom_call.1} parent=51 // pred_region
            %s290 = ssub.s32 2, 1
            loop: start=0, step=1, limit=1
            $region68: #{tpu_custom_call.1} parent=66 // loop_pre_header
              _
            $region69: #{tpu_custom_call.1} parent=66 // loop_header
              %s292 = sphi 0, %s296
              %p293 = scmp.ge.s32.totalorder %s292, 1
              %s297 = sphi %s270, %s270
              %s298 = sphi [#allocation2], [#allocation2]
            $region70: #{tpu_custom_call.1} parent=66 // loop_header_branch
              %295 = sbr.rel (%p293) target = $region74
            $region71: #{tpu_custom_call.1} parent=66 // loop_body
              %v299 = vld [vmem:[%s297] sm:%s290]
              %300 = vst [vmem:[%s298] sm:%s290] %v299
            $region72: #{tpu_custom_call.1} parent=66 // loop_footer
              %s296 = sadd.s32 1, %s292
            $region73: #{tpu_custom_call.1} parent=66 // loop_footer_branch
              %291 = sbr.rel target = $region69
            $region74: #{tpu_custom_call.1} parent=66 // loop_exit
              _
          $region67: #{tpu_custom_call.1} parent=51 // pred_fallthru
            _
        $region52: #{tpu_custom_call.1} parent=47 // pred_fallthru
          _
        // Predicated region
        $region53: #{tpu_custom_call.1} parent=47 // pred_check
          _
        $region54: #{tpu_custom_call.1} parent=47 // pred_check_branch
          %274 = sbr.rel (0) target = $region56
        $region55: #{tpu_custom_call.1} parent=47 // pred_region
          %s276 = ssub.s32 2, 1
          loop: start=0, step=1, limit=1
          $region57: #{tpu_custom_call.1} parent=55 // loop_pre_header
            _
          $region58: #{tpu_custom_call.1} parent=55 // loop_header
            %s278 = sphi 0, %s282
            %p279 = scmp.ge.s32.totalorder %s278, 1
            %s283 = sphi %s270, %s270
            %s284 = sphi [#allocation2], [#allocation2]
          $region59: #{tpu_custom_call.1} parent=55 // loop_header_branch
            %281 = sbr.rel (%p279) target = $region63
          $region60: #{tpu_custom_call.1} parent=55 // loop_body
            %v285 = vld [vmem:[%s283] sm:%s276]
            %286 = vst [vmem:[%s284] sm:%s276] %v285
          $region61: #{tpu_custom_call.1} parent=55 // loop_footer
            %s282 = sadd.s32 1, %s278
          $region62: #{tpu_custom_call.1} parent=55 // loop_footer_branch
            %277 = sbr.rel target = $region58
          $region63: #{tpu_custom_call.1} parent=55 // loop_exit
            _
        $region56: #{tpu_custom_call.1} parent=47 // pred_fallthru
          _
        // Predicated region
        $region75: #{tpu_custom_call.1} parent=47 // pred_check
          _
        $region76: #{tpu_custom_call.1} parent=47 // pred_check_branch
          %303 = sbr.rel (0) target = $region78
        $region77: #{tpu_custom_call.1} parent=47 // pred_region
          %304 = vsyncadd [#allocation3], 16
        $region78: #{tpu_custom_call.1} parent=47 // pred_fallthru
          _
        %s305 = sadd.s32 %s268, 1
        %s306 = sld [smem:[#allocation5 + %s305]]
        %s307 = scalar_lea.vmem %s1, %s306
        %s308 = scalar_lea.vmem [#allocation2], 1
        %s309 = scalar_lea.sflag [#allocation3], 1
        // Predicated region
        $region79: #{tpu_custom_call.1} parent=47 // pred_check
          _
        $region80: #{tpu_custom_call.1} parent=47 // pred_check_branch
          %311 = sbr.rel target = $region82
        $region81: #{tpu_custom_call.1} parent=47 // pred_region
          // Predicated region
          $region94: #{tpu_custom_call.1} parent=81 // pred_check
            _
          $region95: #{tpu_custom_call.1} parent=81 // pred_check_branch
            %327 = sbr.rel (0) target = $region97
          $region96: #{tpu_custom_call.1} parent=81 // pred_region
            %s329 = ssub.s32 2, 1
            loop: start=0, step=1, limit=1
            $region98: #{tpu_custom_call.1} parent=96 // loop_pre_header
              _
            $region99: #{tpu_custom_call.1} parent=96 // loop_header
              %s331 = sphi 0, %s335
              %p332 = scmp.ge.s32.totalorder %s331, 1
              %s336 = sphi %s307, %s307
              %s337 = sphi %s308, %s308
            $region100: #{tpu_custom_call.1} parent=96 // loop_header_branch
              %334 = sbr.rel (%p332) target = $region104
            $region101: #{tpu_custom_call.1} parent=96 // loop_body
              %v338 = vld [vmem:[%s336] sm:%s329]
              %339 = vst [vmem:[%s337] sm:%s329] %v338
            $region102: #{tpu_custom_call.1} parent=96 // loop_footer
              %s335 = sadd.s32 1, %s331
            $region103: #{tpu_custom_call.1} parent=96 // loop_footer_branch
              %330 = sbr.rel target = $region99
            $region104: #{tpu_custom_call.1} parent=96 // loop_exit
              _
          $region97: #{tpu_custom_call.1} parent=81 // pred_fallthru
            _
        $region82: #{tpu_custom_call.1} parent=47 // pred_fallthru
          _
        // Predicated region
        $region83: #{tpu_custom_call.1} parent=47 // pred_check
          _
        $region84: #{tpu_custom_call.1} parent=47 // pred_check_branch
          %313 = sbr.rel (0) target = $region86
        $region85: #{tpu_custom_call.1} parent=47 // pred_region
          %s315 = ssub.s32 2, 1
          loop: start=0, step=1, limit=1
          $region87: #{tpu_custom_call.1} parent=85 // loop_pre_header
            _
          $region88: #{tpu_custom_call.1} parent=85 // loop_header
            %s317 = sphi 0, %s321
            %p318 = scmp.ge.s32.totalorder %s317, 1
            %s322 = sphi %s307, %s307
            %s323 = sphi %s308, %s308
          $region89: #{tpu_custom_call.1} parent=85 // loop_header_branch
            %320 = sbr.rel (%p318) target = $region93
          $region90: #{tpu_custom_call.1} parent=85 // loop_body
            %v324 = vld [vmem:[%s322] sm:%s315]
            %325 = vst [vmem:[%s323] sm:%s315] %v324
          $region91: #{tpu_custom_call.1} parent=85 // loop_footer
            %s321 = sadd.s32 1, %s317
          $region92: #{tpu_custom_call.1} parent=85 // loop_footer_branch
            %316 = sbr.rel target = $region88
          $region93: #{tpu_custom_call.1} parent=85 // loop_exit
            _
        $region86: #{tpu_custom_call.1} parent=47 // pred_fallthru
          _
        // Predicated region
        $region105: #{tpu_custom_call.1} parent=47 // pred_check
          _
        $region106: #{tpu_custom_call.1} parent=47 // pred_check_branch
          %342 = sbr.rel (0) target = $region108
        $region107: #{tpu_custom_call.1} parent=47 // pred_region
          %343 = vsyncadd %s309, 16
        $region108: #{tpu_custom_call.1} parent=47 // pred_fallthru
          _
        %s344 = sadd.s32 %s268, 2
        %s345 = sld [smem:[#allocation5 + %s344]]
        %s346 = scalar_lea.vmem %s1, %s345
        %s347 = scalar_lea.vmem [#allocation2], 2
        %s348 = scalar_lea.sflag [#allocation3], 2
        // Predicated region
        $region109: #{tpu_custom_call.1} parent=47 // pred_check
          _
        $region110: #{tpu_custom_call.1} parent=47 // pred_check_branch
          %350 = sbr.rel target = $region112
        $region111: #{tpu_custom_call.1} parent=47 // pred_region
          // Predicated region
          $region124: #{tpu_custom_call.1} parent=111 // pred_check
            _
          $region125: #{tpu_custom_call.1} parent=111 // pred_check_branch
            %366 = sbr.rel (0) target = $region127
          $region126: #{tpu_custom_call.1} parent=111 // pred_region
            %s368 = ssub.s32 2, 1
            loop: start=0, step=1, limit=1
            $region128: #{tpu_custom_call.1} parent=126 // loop_pre_header
              _
            $region129: #{tpu_custom_call.1} parent=126 // loop_header
              %s370 = sphi 0, %s374
              %p371 = scmp.ge.s32.totalorder %s370, 1
              %s375 = sphi %s346, %s346
              %s376 = sphi %s347, %s347
            $region130: #{tpu_custom_call.1} parent=126 // loop_header_branch
              %373 = sbr.rel (%p371) target = $region134
            $region131: #{tpu_custom_call.1} parent=126 // loop_body
              %v377 = vld [vmem:[%s375] sm:%s368]
              %378 = vst [vmem:[%s376] sm:%s368] %v377
            $region132: #{tpu_custom_call.1} parent=126 // loop_footer
              %s374 = sadd.s32 1, %s370
            $region133: #{tpu_custom_call.1} parent=126 // loop_footer_branch
              %369 = sbr.rel target = $region129
            $region134: #{tpu_custom_call.1} parent=126 // loop_exit
              _
          $region127: #{tpu_custom_call.1} parent=111 // pred_fallthru
            _
        $region112: #{tpu_custom_call.1} parent=47 // pred_fallthru
          _
        // Predicated region
        $region113: #{tpu_custom_call.1} parent=47 // pred_check
          _
        $region114: #{tpu_custom_call.1} parent=47 // pred_check_branch
          %352 = sbr.rel (0) target = $region116
        $region115: #{tpu_custom_call.1} parent=47 // pred_region
          %s354 = ssub.s32 2, 1
          loop: start=0, step=1, limit=1
          $region117: #{tpu_custom_call.1} parent=115 // loop_pre_header
            _
          $region118: #{tpu_custom_call.1} parent=115 // loop_header
            %s356 = sphi 0, %s360
            %p357 = scmp.ge.s32.totalorder %s356, 1
            %s361 = sphi %s346, %s346
            %s362 = sphi %s347, %s347
          $region119: #{tpu_custom_call.1} parent=115 // loop_header_branch
            %359 = sbr.rel (%p357) target = $region123
          $region120: #{tpu_custom_call.1} parent=115 // loop_body
            %v363 = vld [vmem:[%s361] sm:%s354]
            %364 = vst [vmem:[%s362] sm:%s354] %v363
          $region121: #{tpu_custom_call.1} parent=115 // loop_footer
            %s360 = sadd.s32 1, %s356
          $region122: #{tpu_custom_call.1} parent=115 // loop_footer_branch
            %355 = sbr.rel target = $region118
          $region123: #{tpu_custom_call.1} parent=115 // loop_exit
            _
        $region116: #{tpu_custom_call.1} parent=47 // pred_fallthru
          _
        // Predicated region
        $region135: #{tpu_custom_call.1} parent=47 // pred_check
          _
        $region136: #{tpu_custom_call.1} parent=47 // pred_check_branch
          %381 = sbr.rel (0) target = $region138
        $region137: #{tpu_custom_call.1} parent=47 // pred_region
          %382 = vsyncadd %s348, 16
        $region138: #{tpu_custom_call.1} parent=47 // pred_fallthru
          _
        %s383 = sadd.s32 %s268, 3
        %s384 = sld [smem:[#allocation5 + %s383]]
        %s385 = scalar_lea.vmem %s1, %s384
        %s386 = scalar_lea.vmem [#allocation2], 3
        %s387 = scalar_lea.sflag [#allocation3], 3
        // Predicated region
        $region139: #{tpu_custom_call.1} parent=47 // pred_check
          _
        $region140: #{tpu_custom_call.1} parent=47 // pred_check_branch
          %389 = sbr.rel target = $region142
        $region141: #{tpu_custom_call.1} parent=47 // pred_region
          // Predicated region
          $region154: #{tpu_custom_call.1} parent=141 // pred_check
            _
          $region155: #{tpu_custom_call.1} parent=141 // pred_check_branch
            %405 = sbr.rel (0) target = $region157
          $region156: #{tpu_custom_call.1} parent=141 // pred_region
            %s407 = ssub.s32 2, 1
            loop: start=0, step=1, limit=1
            $region158: #{tpu_custom_call.1} parent=156 // loop_pre_header
              _
            $region159: #{tpu_custom_call.1} parent=156 // loop_header
              %s409 = sphi 0, %s413
              %p410 = scmp.ge.s32.totalorder %s409, 1
              %s414 = sphi %s385, %s385
              %s415 = sphi %s386, %s386
            $region160: #{tpu_custom_call.1} parent=156 // loop_header_branch
              %412 = sbr.rel (%p410) target = $region164
            $region161: #{tpu_custom_call.1} parent=156 // loop_body
              %v416 = vld [vmem:[%s414] sm:%s407]
              %417 = vst [vmem:[%s415] sm:%s407] %v416
            $region162: #{tpu_custom_call.1} parent=156 // loop_footer
              %s413 = sadd.s32 1, %s409
            $region163: #{tpu_custom_call.1} parent=156 // loop_footer_branch
              %408 = sbr.rel target = $region159
            $region164: #{tpu_custom_call.1} parent=156 // loop_exit
              _
          $region157: #{tpu_custom_call.1} parent=141 // pred_fallthru
            _
        $region142: #{tpu_custom_call.1} parent=47 // pred_fallthru
          _
        // Predicated region
        $region143: #{tpu_custom_call.1} parent=47 // pred_check
          _
        $region144: #{tpu_custom_call.1} parent=47 // pred_check_branch
          %391 = sbr.rel (0) target = $region146
        $region145: #{tpu_custom_call.1} parent=47 // pred_region
          %s393 = ssub.s32 2, 1
          loop: start=0, step=1, limit=1
          $region147: #{tpu_custom_call.1} parent=145 // loop_pre_header
            _
          $region148: #{tpu_custom_call.1} parent=145 // loop_header
            %s395 = sphi 0, %s399
            %p396 = scmp.ge.s32.totalorder %s395, 1
            %s400 = sphi %s385, %s385
            %s401 = sphi %s386, %s386
          $region149: #{tpu_custom_call.1} parent=145 // loop_header_branch
            %398 = sbr.rel (%p396) target = $region153
          $region150: #{tpu_custom_call.1} parent=145 // loop_body
            %v402 = vld [vmem:[%s400] sm:%s393]
            %403 = vst [vmem:[%s401] sm:%s393] %v402
          $region151: #{tpu_custom_call.1} parent=145 // loop_footer
            %s399 = sadd.s32 1, %s395
          $region152: #{tpu_custom_call.1} parent=145 // loop_footer_branch
            %394 = sbr.rel target = $region148
          $region153: #{tpu_custom_call.1} parent=145 // loop_exit
            _
        $region146: #{tpu_custom_call.1} parent=47 // pred_fallthru
          _
        // Predicated region
        $region165: #{tpu_custom_call.1} parent=47 // pred_check
          _
        $region166: #{tpu_custom_call.1} parent=47 // pred_check_branch
          %420 = sbr.rel (0) target = $region168
        $region167: #{tpu_custom_call.1} parent=47 // pred_region
          %421 = vsyncadd %s387, 16
        $region168: #{tpu_custom_call.1} parent=47 // pred_fallthru
          _
        %s422 = sadd.s32 %s268, 4
        %s423 = sld [smem:[#allocation5 + %s422]]
        %s424 = scalar_lea.vmem %s1, %s423
        %s425 = scalar_lea.vmem [#allocation2], 4
        %s426 = scalar_lea.sflag [#allocation3], 4
        // Predicated region
        $region169: #{tpu_custom_call.1} parent=47 // pred_check
          _
        $region170: #{tpu_custom_call.1} parent=47 // pred_check_branch
          %428 = sbr.rel target = $region172
        $region171: #{tpu_custom_call.1} parent=47 // pred_region
          // Predicated region
          $region184: #{tpu_custom_call.1} parent=171 // pred_check
            _
          $region185: #{tpu_custom_call.1} parent=171 // pred_check_branch
            %444 = sbr.rel (0) target = $region187
          $region186: #{tpu_custom_call.1} parent=171 // pred_region
            %s446 = ssub.s32 2, 1
            loop: start=0, step=1, limit=1
            $region188: #{tpu_custom_call.1} parent=186 // loop_pre_header
              _
            $region189: #{tpu_custom_call.1} parent=186 // loop_header
              %s448 = sphi 0, %s452
              %p449 = scmp.ge.s32.totalorder %s448, 1
              %s453 = sphi %s424, %s424
              %s454 = sphi %s425, %s425
            $region190: #{tpu_custom_call.1} parent=186 // loop_header_branch
              %451 = sbr.rel (%p449) target = $region194
            $region191: #{tpu_custom_call.1} parent=186 // loop_body
              %v455 = vld [vmem:[%s453] sm:%s446]
              %456 = vst [vmem:[%s454] sm:%s446] %v455
            $region192: #{tpu_custom_call.1} parent=186 // loop_footer
              %s452 = sadd.s32 1, %s448
            $region193: #{tpu_custom_call.1} parent=186 // loop_footer_branch
              %447 = sbr.rel target = $region189
            $region194: #{tpu_custom_call.1} parent=186 // loop_exit
              _
          $region187: #{tpu_custom_call.1} parent=171 // pred_fallthru
            _
        $region172: #{tpu_custom_call.1} parent=47 // pred_fallthru
          _
        // Predicated region
        $region173: #{tpu_custom_call.1} parent=47 // pred_check
          _
        $region174: #{tpu_custom_call.1} parent=47 // pred_check_branch
          %430 = sbr.rel (0) target = $region176
        $region175: #{tpu_custom_call.1} parent=47 // pred_region
          %s432 = ssub.s32 2, 1
          loop: start=0, step=1, limit=1
          $region177: #{tpu_custom_call.1} parent=175 // loop_pre_header
            _
          $region178: #{tpu_custom_call.1} parent=175 // loop_header
            %s434 = sphi 0, %s438
            %p435 = scmp.ge.s32.totalorder %s434, 1
            %s439 = sphi %s424, %s424
            %s440 = sphi %s425, %s425
          $region179: #{tpu_custom_call.1} parent=175 // loop_header_branch
            %437 = sbr.rel (%p435) target = $region183
          $region180: #{tpu_custom_call.1} parent=175 // loop_body
            %v441 = vld [vmem:[%s439] sm:%s432]
            %442 = vst [vmem:[%s440] sm:%s432] %v441
          $region181: #{tpu_custom_call.1} parent=175 // loop_footer
            %s438 = sadd.s32 1, %s434
          $region182: #{tpu_custom_call.1} parent=175 // loop_footer_branch
            %433 = sbr.rel target = $region178
          $region183: #{tpu_custom_call.1} parent=175 // loop_exit
            _
        $region176: #{tpu_custom_call.1} parent=47 // pred_fallthru
          _
        // Predicated region
        $region195: #{tpu_custom_call.1} parent=47 // pred_check
          _
        $region196: #{tpu_custom_call.1} parent=47 // pred_check_branch
          %459 = sbr.rel (0) target = $region198
        $region197: #{tpu_custom_call.1} parent=47 // pred_region
          %460 = vsyncadd %s426, 16
        $region198: #{tpu_custom_call.1} parent=47 // pred_fallthru
          _
        %s461 = sadd.s32 %s268, 5
        %s462 = sld [smem:[#allocation5 + %s461]]
        %s463 = scalar_lea.vmem %s1, %s462
        %s464 = scalar_lea.vmem [#allocation2], 5
        %s465 = scalar_lea.sflag [#allocation3], 5
        // Predicated region
        $region199: #{tpu_custom_call.1} parent=47 // pred_check
          _
        $region200: #{tpu_custom_call.1} parent=47 // pred_check_branch
          %467 = sbr.rel target = $region202
        $region201: #{tpu_custom_call.1} parent=47 // pred_region
          // Predicated region
          $region214: #{tpu_custom_call.1} parent=201 // pred_check
            _
          $region215: #{tpu_custom_call.1} parent=201 // pred_check_branch
            %483 = sbr.rel (0) target = $region217
          $region216: #{tpu_custom_call.1} parent=201 // pred_region
            %s485 = ssub.s32 2, 1
            loop: start=0, step=1, limit=1
            $region218: #{tpu_custom_call.1} parent=216 // loop_pre_header
              _
            $region219: #{tpu_custom_call.1} parent=216 // loop_header
              %s487 = sphi 0, %s491
              %p488 = scmp.ge.s32.totalorder %s487, 1
              %s492 = sphi %s463, %s463
              %s493 = sphi %s464, %s464
            $region220: #{tpu_custom_call.1} parent=216 // loop_header_branch
              %490 = sbr.rel (%p488) target = $region224
            $region221: #{tpu_custom_call.1} parent=216 // loop_body
              %v494 = vld [vmem:[%s492] sm:%s485]
              %495 = vst [vmem:[%s493] sm:%s485] %v494
            $region222: #{tpu_custom_call.1} parent=216 // loop_footer
              %s491 = sadd.s32 1, %s487
            $region223: #{tpu_custom_call.1} parent=216 // loop_footer_branch
              %486 = sbr.rel target = $region219
            $region224: #{tpu_custom_call.1} parent=216 // loop_exit
              _
          $region217: #{tpu_custom_call.1} parent=201 // pred_fallthru
            _
        $region202: #{tpu_custom_call.1} parent=47 // pred_fallthru
          _
        // Predicated region
        $region203: #{tpu_custom_call.1} parent=47 // pred_check
          _
        $region204: #{tpu_custom_call.1} parent=47 // pred_check_branch
          %469 = sbr.rel (0) target = $region206
        $region205: #{tpu_custom_call.1} parent=47 // pred_region
          %s471 = ssub.s32 2, 1
          loop: start=0, step=1, limit=1
          $region207: #{tpu_custom_call.1} parent=205 // loop_pre_header
            _
          $region208: #{tpu_custom_call.1} parent=205 // loop_header
            %s473 = sphi 0, %s477
            %p474 = scmp.ge.s32.totalorder %s473, 1
            %s478 = sphi %s463, %s463
            %s479 = sphi %s464, %s464
          $region209: #{tpu_custom_call.1} parent=205 // loop_header_branch
            %476 = sbr.rel (%p474) target = $region213
          $region210: #{tpu_custom_call.1} parent=205 // loop_body
            %v480 = vld [vmem:[%s478] sm:%s471]
            %481 = vst [vmem:[%s479] sm:%s471] %v480
          $region211: #{tpu_custom_call.1} parent=205 // loop_footer
            %s477 = sadd.s32 1, %s473
          $region212: #{tpu_custom_call.1} parent=205 // loop_footer_branch
            %472 = sbr.rel target = $region208
          $region213: #{tpu_custom_call.1} parent=205 // loop_exit
            _
        $region206: #{tpu_custom_call.1} parent=47 // pred_fallthru
          _
        // Predicated region
        $region225: #{tpu_custom_call.1} parent=47 // pred_check
          _
        $region226: #{tpu_custom_call.1} parent=47 // pred_check_branch
          %498 = sbr.rel (0) target = $region228
        $region227: #{tpu_custom_call.1} parent=47 // pred_region
          %499 = vsyncadd %s465, 16
        $region228: #{tpu_custom_call.1} parent=47 // pred_fallthru
          _
        %s500 = sadd.s32 %s268, 6
        %s501 = sld [smem:[#allocation5 + %s500]]
        %s502 = scalar_lea.vmem %s1, %s501
        %s503 = scalar_lea.vmem [#allocation2], 6
        %s504 = scalar_lea.sflag [#allocation3], 6
        // Predicated region
        $region229: #{tpu_custom_call.1} parent=47 // pred_check
          _
        $region230: #{tpu_custom_call.1} parent=47 // pred_check_branch
          %506 = sbr.rel target = $region232
        $region231: #{tpu_custom_call.1} parent=47 // pred_region
          // Predicated region
          $region244: #{tpu_custom_call.1} parent=231 // pred_check
            _
          $region245: #{tpu_custom_call.1} parent=231 // pred_check_branch
            %522 = sbr.rel (0) target = $region247
          $region246: #{tpu_custom_call.1} parent=231 // pred_region
            %s524 = ssub.s32 2, 1
            loop: start=0, step=1, limit=1
            $region248: #{tpu_custom_call.1} parent=246 // loop_pre_header
              _
            $region249: #{tpu_custom_call.1} parent=246 // loop_header
              %s526 = sphi 0, %s530
              %p527 = scmp.ge.s32.totalorder %s526, 1
              %s531 = sphi %s502, %s502
              %s532 = sphi %s503, %s503
            $region250: #{tpu_custom_call.1} parent=246 // loop_header_branch
              %529 = sbr.rel (%p527) target = $region254
            $region251: #{tpu_custom_call.1} parent=246 // loop_body
              %v533 = vld [vmem:[%s531] sm:%s524]
              %534 = vst [vmem:[%s532] sm:%s524] %v533
            $region252: #{tpu_custom_call.1} parent=246 // loop_footer
              %s530 = sadd.s32 1, %s526
            $region253: #{tpu_custom_call.1} parent=246 // loop_footer_branch
              %525 = sbr.rel target = $region249
            $region254: #{tpu_custom_call.1} parent=246 // loop_exit
              _
          $region247: #{tpu_custom_call.1} parent=231 // pred_fallthru
            _
        $region232: #{tpu_custom_call.1} parent=47 // pred_fallthru
          _
        // Predicated region
        $region233: #{tpu_custom_call.1} parent=47 // pred_check
          _
        $region234: #{tpu_custom_call.1} parent=47 // pred_check_branch
          %508 = sbr.rel (0) target = $region236
        $region235: #{tpu_custom_call.1} parent=47 // pred_region
          %s510 = ssub.s32 2, 1
          loop: start=0, step=1, limit=1
          $region237: #{tpu_custom_call.1} parent=235 // loop_pre_header
            _
          $region238: #{tpu_custom_call.1} parent=235 // loop_header
            %s512 = sphi 0, %s516
            %p513 = scmp.ge.s32.totalorder %s512, 1
            %s517 = sphi %s502, %s502
            %s518 = sphi %s503, %s503
          $region239: #{tpu_custom_call.1} parent=235 // loop_header_branch
            %515 = sbr.rel (%p513) target = $region243
          $region240: #{tpu_custom_call.1} parent=235 // loop_body
            %v519 = vld [vmem:[%s517] sm:%s510]
            %520 = vst [vmem:[%s518] sm:%s510] %v519
          $region241: #{tpu_custom_call.1} parent=235 // loop_footer
            %s516 = sadd.s32 1, %s512
          $region242: #{tpu_custom_call.1} parent=235 // loop_footer_branch
            %511 = sbr.rel target = $region238
          $region243: #{tpu_custom_call.1} parent=235 // loop_exit
            _
        $region236: #{tpu_custom_call.1} parent=47 // pred_fallthru
          _
        // Predicated region
        $region255: #{tpu_custom_call.1} parent=47 // pred_check
          _
        $region256: #{tpu_custom_call.1} parent=47 // pred_check_branch
          %537 = sbr.rel (0) target = $region258
        $region257: #{tpu_custom_call.1} parent=47 // pred_region
          %538 = vsyncadd %s504, 16
        $region258: #{tpu_custom_call.1} parent=47 // pred_fallthru
          _
        %s539 = sadd.s32 %s268, 7
        %s540 = sld [smem:[#allocation5 + %s539]]
        %s541 = scalar_lea.vmem %s1, %s540
        %s542 = scalar_lea.vmem [#allocation2], 7
        %s543 = scalar_lea.sflag [#allocation3], 7
        // Predicated region
        $region259: #{tpu_custom_call.1} parent=47 // pred_check
          _
        $region260: #{tpu_custom_call.1} parent=47 // pred_check_branch
          %545 = sbr.rel target = $region262
        $region261: #{tpu_custom_call.1} parent=47 // pred_region
          // Predicated region
          $region274: #{tpu_custom_call.1} parent=261 // pred_check
            _
          $region275: #{tpu_custom_call.1} parent=261 // pred_check_branch
            %561 = sbr.rel (0) target = $region277
          $region276: #{tpu_custom_call.1} parent=261 // pred_region
            %s563 = ssub.s32 2, 1
            loop: start=0, step=1, limit=1
            $region278: #{tpu_custom_call.1} parent=276 // loop_pre_header
              _
            $region279: #{tpu_custom_call.1} parent=276 // loop_header
              %s565 = sphi 0, %s569
              %p566 = scmp.ge.s32.totalorder %s565, 1
              %s570 = sphi %s541, %s541
              %s571 = sphi %s542, %s542
            $region280: #{tpu_custom_call.1} parent=276 // loop_header_branch
              %568 = sbr.rel (%p566) target = $region284
            $region281: #{tpu_custom_call.1} parent=276 // loop_body
              %v572 = vld [vmem:[%s570] sm:%s563]
              %573 = vst [vmem:[%s571] sm:%s563] %v572
            $region282: #{tpu_custom_call.1} parent=276 // loop_footer
              %s569 = sadd.s32 1, %s565
            $region283: #{tpu_custom_call.1} parent=276 // loop_footer_branch
              %564 = sbr.rel target = $region279
            $region284: #{tpu_custom_call.1} parent=276 // loop_exit
              _
          $region277: #{tpu_custom_call.1} parent=261 // pred_fallthru
            _
        $region262: #{tpu_custom_call.1} parent=47 // pred_fallthru
          _
        // Predicated region
        $region263: #{tpu_custom_call.1} parent=47 // pred_check
          _
        $region264: #{tpu_custom_call.1} parent=47 // pred_check_branch
          %547 = sbr.rel (0) target = $region266
        $region265: #{tpu_custom_call.1} parent=47 // pred_region
          %s549 = ssub.s32 2, 1
          loop: start=0, step=1, limit=1
          $region267: #{tpu_custom_call.1} parent=265 // loop_pre_header
            _
          $region268: #{tpu_custom_call.1} parent=265 // loop_header
            %s551 = sphi 0, %s555
            %p552 = scmp.ge.s32.totalorder %s551, 1
            %s556 = sphi %s541, %s541
            %s557 = sphi %s542, %s542
          $region269: #{tpu_custom_call.1} parent=265 // loop_header_branch
            %554 = sbr.rel (%p552) target = $region273
          $region270: #{tpu_custom_call.1} parent=265 // loop_body
            %v558 = vld [vmem:[%s556] sm:%s549]
            %559 = vst [vmem:[%s557] sm:%s549] %v558
          $region271: #{tpu_custom_call.1} parent=265 // loop_footer
            %s555 = sadd.s32 1, %s551
          $region272: #{tpu_custom_call.1} parent=265 // loop_footer_branch
            %550 = sbr.rel target = $region268
          $region273: #{tpu_custom_call.1} parent=265 // loop_exit
            _
        $region266: #{tpu_custom_call.1} parent=47 // pred_fallthru
          _
        // Predicated region
        $region285: #{tpu_custom_call.1} parent=47 // pred_check
          _
        $region286: #{tpu_custom_call.1} parent=47 // pred_check_branch
          %576 = sbr.rel (0) target = $region288
        $region287: #{tpu_custom_call.1} parent=47 // pred_region
          %577 = vsyncadd %s543, 16
        $region288: #{tpu_custom_call.1} parent=47 // pred_fallthru
          _
        loop: start=0, step=1, limit=64
        $region289: #{tpu_custom_call.1} parent=47 // loop_pre_header
          _
        $region290: #{tpu_custom_call.1} parent=47 // loop_header
          %s579 = sphi 0, %s583
          %p580 = scmp.ge.s32.totalorder %s579, 64
        $region291: #{tpu_custom_call.1} parent=47 // loop_header_branch
          %582 = sbr.rel (%p580) target = $region295
        $region292: #{tpu_custom_call.1} parent=47 // loop_body
          %p584 = scmp.lt.s32.totalorder %s579, 0
          %s585 = ssub.s32 0, %s579
          %s586 = scalar_select %p584, %s585, %s579
          %s587 = sand.u32 %s586, 7
          %s588 = ssub.s32 0, %s587
          %s589 = scalar_select %p584, %s588, %s587
          %p590 = scmp.ne.s32.totalorder %s589, 0
          %p591 = scmp.lt.s32.totalorder %s589, 0
          %p592 = pnand %p591, %p590
          %p593 = pneg %p592
          %s594 = sadd.s32 %s589, 8
          %s595 = scalar_select %p593, %s594, %s589
          %s596 = scalar_lea.sflag [#allocation3], %s595
          %s597 = smul.u32 1, 1
          %s598 = sshll.u32 %s597, 4
          %599 = dma.done %s596, %s598
          %s600 = sadd.s32 %s579, 8
          %p601 = scmp.lt.s32.totalorder %s600, 64
          // Predicated region
          $region296: #{tpu_custom_call.1} parent=292 // pred_check
            %p602 = pneg %p601
          $region297: #{tpu_custom_call.1} parent=292 // pred_check_branch
            %604 = sbr.rel (%p602) target = $region299
          $region298: #{tpu_custom_call.1} parent=292 // pred_region
            %s605 = sadd.s32 %s268, %s600
            %s606 = sld [smem:[#allocation5 + %s605]]
            %p607 = scmp.lt.s32.totalorder %s600, 0
            %s608 = ssub.s32 0, %s600
            %s609 = scalar_select %p607, %s608, %s600
            %s610 = sand.u32 %s609, 7
            %s611 = ssub.s32 0, %s610
            %s612 = scalar_select %p607, %s611, %s610
            %p613 = scmp.ne.s32.totalorder %s612, 0
            %p614 = scmp.lt.s32.totalorder %s612, 0
            %p615 = pnand %p614, %p613
            %p616 = pneg %p615
            %s617 = sadd.s32 %s612, 8
            %s618 = scalar_select %p616, %s617, %s612
            %s619 = scalar_lea.vmem %s1, %s606
            %s620 = scalar_lea.vmem [#allocation2], %s600
            %s621 = scalar_lea.sflag [#allocation3], %s618
            // Predicated region
            $region300: #{tpu_custom_call.1} parent=298 // pred_check
              _
            $region301: #{tpu_custom_call.1} parent=298 // pred_check_branch
              %623 = sbr.rel target = $region303
            $region302: #{tpu_custom_call.1} parent=298 // pred_region
              // Predicated region
              $region315: #{tpu_custom_call.1} parent=302 // pred_check
                _
              $region316: #{tpu_custom_call.1} parent=302 // pred_check_branch
                %639 = sbr.rel (0) target = $region318
              $region317: #{tpu_custom_call.1} parent=302 // pred_region
                %s641 = ssub.s32 2, 1
                loop: start=0, step=1, limit=1
                $region319: #{tpu_custom_call.1} parent=317 // loop_pre_header
                  _
                $region320: #{tpu_custom_call.1} parent=317 // loop_header
                  %s643 = sphi 0, %s647
                  %p644 = scmp.ge.s32.totalorder %s643, 1
                  %s648 = sphi %s619, %s619
                  %s649 = sphi %s620, %s620
                $region321: #{tpu_custom_call.1} parent=317 // loop_header_branch
                  %646 = sbr.rel (%p644) target = $region325
                $region322: #{tpu_custom_call.1} parent=317 // loop_body
                  %v650 = vld [vmem:[%s648] sm:%s641]
                  %651 = vst [vmem:[%s649] sm:%s641] %v650
                $region323: #{tpu_custom_call.1} parent=317 // loop_footer
                  %s647 = sadd.s32 1, %s643
                $region324: #{tpu_custom_call.1} parent=317 // loop_footer_branch
                  %642 = sbr.rel target = $region320
                $region325: #{tpu_custom_call.1} parent=317 // loop_exit
                  _
              $region318: #{tpu_custom_call.1} parent=302 // pred_fallthru
                _
            $region303: #{tpu_custom_call.1} parent=298 // pred_fallthru
              _
            // Predicated region
            $region304: #{tpu_custom_call.1} parent=298 // pred_check
              _
            $region305: #{tpu_custom_call.1} parent=298 // pred_check_branch
              %625 = sbr.rel (0) target = $region307
            $region306: #{tpu_custom_call.1} parent=298 // pred_region
              %s627 = ssub.s32 2, 1
              loop: start=0, step=1, limit=1
              $region308: #{tpu_custom_call.1} parent=306 // loop_pre_header
                _
              $region309: #{tpu_custom_call.1} parent=306 // loop_header
                %s629 = sphi 0, %s633
                %p630 = scmp.ge.s32.totalorder %s629, 1
                %s634 = sphi %s619, %s619
                %s635 = sphi %s620, %s620
              $region310: #{tpu_custom_call.1} parent=306 // loop_header_branch
                %632 = sbr.rel (%p630) target = $region314
              $region311: #{tpu_custom_call.1} parent=306 // loop_body
                %v636 = vld [vmem:[%s634] sm:%s627]
                %637 = vst [vmem:[%s635] sm:%s627] %v636
              $region312: #{tpu_custom_call.1} parent=306 // loop_footer
                %s633 = sadd.s32 1, %s629
              $region313: #{tpu_custom_call.1} parent=306 // loop_footer_branch
                %628 = sbr.rel target = $region309
              $region314: #{tpu_custom_call.1} parent=306 // loop_exit
                _
            $region307: #{tpu_custom_call.1} parent=298 // pred_fallthru
              _
            // Predicated region
            $region326: #{tpu_custom_call.1} parent=298 // pred_check
              _
            $region327: #{tpu_custom_call.1} parent=298 // pred_check_branch
              %654 = sbr.rel (0) target = $region329
            $region328: #{tpu_custom_call.1} parent=298 // pred_region
              %655 = vsyncadd %s621, 16
            $region329: #{tpu_custom_call.1} parent=298 // pred_fallthru
              _
          $region299: #{tpu_custom_call.1} parent=292 // pred_fallthru
            _
        $region293: #{tpu_custom_call.1} parent=47 // loop_footer
          %s583 = sadd.s32 1, %s579
        $region294: #{tpu_custom_call.1} parent=47 // loop_footer_branch
          %578 = sbr.rel target = $region290
        $region295: #{tpu_custom_call.1} parent=47 // loop_exit
          _
        %v656 = vld [vmem:[#allocation2] sm:$0xff]
        %v657 = vld [vmem:[#allocation2 + $0x8] sm:$0xff]
        %v658 = vld [vmem:[#allocation2 + $0x10] sm:$0xff]
        %v659 = vld [vmem:[#allocation2 + $0x18] sm:$0xff]
        %v660 = vld [vmem:[#allocation2 + $0x20] sm:$0xff]
        %v661 = vld [vmem:[#allocation2 + $0x28] sm:$0xff]
        %v662 = vld [vmem:[#allocation2 + $0x30] sm:$0xff]
        %v663 = vld [vmem:[#allocation2 + $0x38] sm:$0xff]
        %v664 = vpack.c.bf16 %v657, %v656
        %v665 = vpack.c.bf16 %v659, %v658
        %v666 = vpack.c.bf16 %v661, %v660
        %v667 = vpack.c.bf16 %v663, %v662
        %v668 = vld [vmem:[%s2] sm:$0xf]
        %v669 = vld [vmem:[%s2 + $0x4] sm:$0xf]
        %v670 = vld [vmem:[%s2 + $0x8] sm:$0xf]
        %v671 = vld [vmem:[%s2 + $0xc] sm:$0xf]
        %v676 = vunpack.c.l.b16 %v668
        %v677 = vunpack.c.l.b16 %v669
        %v678 = vunpack.c.l.b16 %v670
        %v679 = vunpack.c.l.b16 %v671
        %v680 = vpack.c.b16 %v677, %v676
        %v681 = vpack.c.b16 %v679, %v678
        %vm684 = vcmask 261120
        %v686 = vsel %vm684, %v664, 0
        %v689 = vsel %vm684, %v665, 0
        %v692 = vsel %vm684, %v666, 0
        %v695 = vsel %vm684, %v667, 0
        %697 = vmatpush.bf16.msra.mxu0 0
        %698 = vmatpush.bf16.msra.mxu0 0
        %699 = vmatpush.bf16.msra.mxu0 0
        %700 = vmatpush.bf16.msra.mxu0 0
        %701 = vmatpush.bf16.msra.mxu0 0
        %702 = vmatpush.bf16.msra.mxu0 0
        %703 = vmatpush.bf16.msra.mxu0 %v681
        %704 = vmatpush.bf16.msra.mxu0 %v680
        %705 = vmatmul.bf16.gmra.mxu0 %v686
        %v706 = vpop.f32.mrf.mxu0
        %v707 = vadd.f32 0.0, %v706
        %v708 = vpop.f32.mrf.mxu0
        %v709 = vadd.f32 0.0, %v708
        %710 = vmatmul.bf16.gmra.mxu0 %v689
        %v711 = vpop.f32.mrf.mxu0
        %v712 = vadd.f32 0.0, %v711
        %v713 = vpop.f32.mrf.mxu0
        %v714 = vadd.f32 0.0, %v713
        %715 = vmatmul.bf16.gmra.mxu0 %v692
        %v716 = vpop.f32.mrf.mxu0
        %v717 = vadd.f32 0.0, %v716
        %v718 = vpop.f32.mrf.mxu0
        %v719 = vadd.f32 0.0, %v718
        %720 = vmatmul.bf16.gmra.mxu0 %v695
        %v721 = vpop.f32.mrf.mxu0
        %v722 = vadd.f32 0.0, %v721
        %v723 = vpop.f32.mrf.mxu0
        %v724 = vadd.f32 0.0, %v723
        %725 = vdwg.mxu0
        %v726 = vld [vmem:[%s3] sm:$0x1]
        %v727 = vperm.slane %v726, 0
        %v728 = vmul.f32 %v707, %v727
        %v729 = vmul.f32 %v709, %v727
        %v730 = vmul.f32 %v712, %v727
        %v731 = vmul.f32 %v714, %v727
        %v732 = vmul.f32 %v717, %v727
        %v733 = vmul.f32 %v719, %v727
        %v734 = vmul.f32 %v722, %v727
        %v735 = vmul.f32 %v724, %v727
        %v736 = vld [vmem:[%s3 + $0x1] sm:$0x1]
        %v737 = vperm.slane %v736, 0
        %v738 = vmul.f32 %v707, %v737
        %v739 = vmul.f32 %v709, %v737
        %v740 = vmul.f32 %v712, %v737
        %v741 = vmul.f32 %v714, %v737
        %v742 = vmul.f32 %v717, %v737
        %v743 = vmul.f32 %v719, %v737
        %v744 = vmul.f32 %v722, %v737
        %v745 = vmul.f32 %v724, %v737
        %v746 = vmul.f32 %v737, 0.0
        %vm756 = vcmask 1046528
        %v757 = vrot.slane %v738, 1
        %v758 = vrot.slane %v739, 1
        %v759 = vsel %vm756, %v757, %v758
        %v760 = vrot.slane %v740, 1
        %v761 = vsel %vm756, %v758, %v760
        %v762 = vrot.slane %v741, 1
        %v763 = vsel %vm756, %v760, %v762
        %v764 = vrot.slane %v742, 1
        %v765 = vsel %vm756, %v762, %v764
        %v766 = vrot.slane %v743, 1
        %v767 = vsel %vm756, %v764, %v766
        %v768 = vrot.slane %v744, 1
        %v769 = vsel %vm756, %v766, %v768
        %v770 = vrot.slane %v745, 1
        %v771 = vsel %vm756, %v768, %v770
        %v772 = vrot.slane %v746, 1
        %v773 = vsel %vm756, %v770, %v772
        %v782 = vadd.f32 %v728, %v759
        %v783 = vadd.f32 %v729, %v761
        %v784 = vadd.f32 %v730, %v763
        %v785 = vadd.f32 %v731, %v765
        %v786 = vadd.f32 %v732, %v767
        %v787 = vadd.f32 %v733, %v769
        %v788 = vadd.f32 %v734, %v771
        %v789 = vadd.f32 %v735, %v773
        %v790 = vld [vmem:[%s3 + $0x2] sm:$0x1]
        %v791 = vperm.slane %v790, 0
        %v792 = vmul.f32 %v707, %v791
        %v793 = vmul.f32 %v709, %v791
        %v794 = vmul.f32 %v712, %v791
        %v795 = vmul.f32 %v714, %v791
        %v796 = vmul.f32 %v717, %v791
        %v797 = vmul.f32 %v719, %v791
        %v798 = vmul.f32 %v722, %v791
        %v799 = vmul.f32 %v724, %v791
        %v800 = vmul.f32 %v791, 0.0
        %vm810 = vcmask 1045504
        %v811 = vrot.slane %v792, 2
        %v812 = vrot.slane %v793, 2
        %v813 = vsel %vm810, %v811, %v812
        %v814 = vrot.slane %v794, 2
        %v815 = vsel %vm810, %v812, %v814
        %v816 = vrot.slane %v795, 2
        %v817 = vsel %vm810, %v814, %v816
        %v818 = vrot.slane %v796, 2
        %v819 = vsel %vm810, %v816, %v818
        %v820 = vrot.slane %v797, 2
        %v821 = vsel %vm810, %v818, %v820
        %v822 = vrot.slane %v798, 2
        %v823 = vsel %vm810, %v820, %v822
        %v824 = vrot.slane %v799, 2
        %v825 = vsel %vm810, %v822, %v824
        %v826 = vrot.slane %v800, 2
        %v827 = vsel %vm810, %v824, %v826
        %v836 = vadd.f32 %v782, %v813
        %v837 = vadd.f32 %v783, %v815
        %v838 = vadd.f32 %v784, %v817
        %v839 = vadd.f32 %v785, %v819
        %v840 = vadd.f32 %v786, %v821
        %v841 = vadd.f32 %v787, %v823
        %v842 = vadd.f32 %v788, %v825
        %v843 = vadd.f32 %v789, %v827
        %v844 = vld [vmem:[%s3 + $0x3] sm:$0x1]
        %v845 = vperm.slane %v844, 0
        %v846 = vmul.f32 %v707, %v845
        %v847 = vmul.f32 %v709, %v845
        %v848 = vmul.f32 %v712, %v845
        %v849 = vmul.f32 %v714, %v845
        %v850 = vmul.f32 %v717, %v845
        %v851 = vmul.f32 %v719, %v845
        %v852 = vmul.f32 %v722, %v845
        %v853 = vmul.f32 %v724, %v845
        %v854 = vmul.f32 %v845, 0.0
        %vm864 = vcmask 1044480
        %v865 = vrot.slane %v846, 3
        %v866 = vrot.slane %v847, 3
        %v867 = vsel %vm864, %v865, %v866
        %v868 = vrot.slane %v848, 3
        %v869 = vsel %vm864, %v866, %v868
        %v870 = vrot.slane %v849, 3
        %v871 = vsel %vm864, %v868, %v870
        %v872 = vrot.slane %v850, 3
        %v873 = vsel %vm864, %v870, %v872
        %v874 = vrot.slane %v851, 3
        %v875 = vsel %vm864, %v872, %v874
        %v876 = vrot.slane %v852, 3
        %v877 = vsel %vm864, %v874, %v876
        %v878 = vrot.slane %v853, 3
        %v879 = vsel %vm864, %v876, %v878
        %v880 = vrot.slane %v854, 3
        %v881 = vsel %vm864, %v878, %v880
        %v890 = vadd.f32 %v836, %v867
        %v891 = vadd.f32 %v837, %v869
        %v892 = vadd.f32 %v838, %v871
        %v893 = vadd.f32 %v839, %v873
        %v894 = vadd.f32 %v840, %v875
        %v895 = vadd.f32 %v841, %v877
        %v896 = vadd.f32 %v842, %v879
        %v897 = vadd.f32 %v843, %v881
        %v898 = vld [vmem:[%s3 + $0x4] sm:$0x1]
        %v899 = vperm.slane %v898, 0
        %v900 = vmul.f32 %v707, %v899
        %v901 = vmul.f32 %v709, %v899
        %v902 = vmul.f32 %v712, %v899
        %v903 = vmul.f32 %v714, %v899
        %v904 = vmul.f32 %v717, %v899
        %v905 = vmul.f32 %v719, %v899
        %v906 = vmul.f32 %v722, %v899
        %v907 = vmul.f32 %v724, %v899
        %v908 = vmul.f32 %v899, 0.0
        %vm918 = vcmask 1043456
        %v919 = vrot.slane %v900, 4
        %v920 = vrot.slane %v901, 4
        %v921 = vsel %vm918, %v919, %v920
        %v922 = vrot.slane %v902, 4
        %v923 = vsel %vm918, %v920, %v922
        %v924 = vrot.slane %v903, 4
        %v925 = vsel %vm918, %v922, %v924
        %v926 = vrot.slane %v904, 4
        %v927 = vsel %vm918, %v924, %v926
        %v928 = vrot.slane %v905, 4
        %v929 = vsel %vm918, %v926, %v928
        %v930 = vrot.slane %v906, 4
        %v931 = vsel %vm918, %v928, %v930
        %v932 = vrot.slane %v907, 4
        %v933 = vsel %vm918, %v930, %v932
        %v934 = vrot.slane %v908, 4
        %v935 = vsel %vm918, %v932, %v934
        %v944 = vadd.f32 %v890, %v921
        %v945 = vadd.f32 %v891, %v923
        %v946 = vadd.f32 %v892, %v925
        %v947 = vadd.f32 %v893, %v927
        %v948 = vadd.f32 %v894, %v929
        %v949 = vadd.f32 %v895, %v931
        %v950 = vadd.f32 %v896, %v933
        %v951 = vadd.f32 %v897, %v935
        %v952 = vld [vmem:[%s4] sm:$0xff]
        %v953 = vld [vmem:[%s4 + $0x8] sm:$0xff]
        %v954 = vld [vmem:[%s4 + $0x10] sm:$0xff]
        %v955 = vld [vmem:[%s4 + $0x18] sm:$0xff]
        %v956 = vld [vmem:[%s4 + $0x20] sm:$0xff]
        %v957 = vld [vmem:[%s4 + $0x28] sm:$0xff]
        %v958 = vld [vmem:[%s4 + $0x30] sm:$0xff]
        %v959 = vld [vmem:[%s4 + $0x38] sm:$0xff]
        %v960 = vld [vmem:[%s4 + $0x40] sm:$0xff]
        %v961 = vld [vmem:[%s4 + $0x48] sm:$0xff]
        %v962 = vld [vmem:[%s4 + $0x50] sm:$0xff]
        %v963 = vld [vmem:[%s4 + $0x58] sm:$0xff]
        %v964 = vld [vmem:[%s5] sm:$0x1]
        %v966 = vperm.slane %v964, 0
        %vm968 = vcmask 785408
        %v970 = vsel %vm968, %v944, 0
        %v973 = vsel %vm968, %v945, 0
        %v976 = vsel %vm968, %v946, 0
        %v979 = vsel %vm968, %v947, 0
        %v982 = vsel %vm968, %v948, 0
        %v985 = vsel %vm968, %v949, 0
        %v988 = vsel %vm968, %v950, 0
        %v991 = vsel %vm968, %v951, 0
        %993 = vmatpush.msra.mxu0 0.0
        %994 = vmatpush.msra.mxu0 0.0
        %995 = vmatpush.msra.mxu0 0.0
        %996 = vmatpush.msra.mxu0 0.0
        %997 = vmatpush.msra.mxu0 %v963
        %998 = vmatpush.msra.mxu0 %v962
        %999 = vmatpush.msra.mxu0 %v961
        %1000 = vmatpush.msra.mxu0 %v960
        %1001 = vmatpush.msra.mxu0 %v959
        %1002 = vmatpush.msra.mxu0 %v958
        %1003 = vmatpush.msra.mxu0 %v957
        %1004 = vmatpush.msra.mxu0 %v956
        %1005 = vmatpush.msra.mxu0 %v955
        %1006 = vmatpush.msra.mxu0 %v954
        %1007 = vmatpush.msra.mxu0 %v953
        %1008 = vmatpush.msra.mxu0 %v952
        %1009 = vmatmul.f32.gmra.mxu0 %v970
        %v1010 = vpop.f32.mrf.mxu0
        %v1011 = vadd.f32 %v966, %v1010
        %1012 = vmatmul.f32.gmra.mxu0 %v973
        %v1013 = vpop.f32.mrf.mxu0
        %v1014 = vadd.f32 %v966, %v1013
        %1015 = vmatmul.f32.gmra.mxu0 %v976
        %v1016 = vpop.f32.mrf.mxu0
        %v1017 = vadd.f32 %v966, %v1016
        %1018 = vmatmul.f32.gmra.mxu0 %v979
        %v1019 = vpop.f32.mrf.mxu0
        %v1020 = vadd.f32 %v966, %v1019
        %1021 = vmatmul.f32.gmra.mxu0 %v982
        %v1022 = vpop.f32.mrf.mxu0
        %v1023 = vadd.f32 %v966, %v1022
        %1024 = vmatmul.f32.gmra.mxu0 %v985
        %v1025 = vpop.f32.mrf.mxu0
        %v1026 = vadd.f32 %v966, %v1025
        %1027 = vmatmul.f32.gmra.mxu0 %v988
        %v1028 = vpop.f32.mrf.mxu0
        %v1029 = vadd.f32 %v966, %v1028
        %1030 = vmatmul.f32.gmra.mxu0 %v991
        %v1031 = vpop.f32.mrf.mxu0
        %v1032 = vadd.f32 %v966, %v1031
        %1033 = vdwg.mxu0
        %v1034 = vmax.f32 %v1011, 0.0
        %v1035 = vmax.f32 %v1014, 0.0
        %v1036 = vmax.f32 %v1017, 0.0
        %v1037 = vmax.f32 %v1020, 0.0
        %v1038 = vmax.f32 %v1023, 0.0
        %v1039 = vmax.f32 %v1026, 0.0
        %v1040 = vmax.f32 %v1029, 0.0
        %v1041 = vmax.f32 %v1032, 0.0
        %v1042 = vld [vmem:[%s6] sm:$0xff]
        %v1043 = vld [vmem:[%s6 + $0x8] sm:$0xff]
        %v1044 = vmul.f32 %v1034, %v1042
        %v1045 = vmul.f32 %v1035, %v1043
        %v1046 = vmul.f32 %v1036, %v1042
        %v1047 = vmul.f32 %v1037, %v1043
        %v1048 = vmul.f32 %v1038, %v1042
        %v1049 = vmul.f32 %v1039, %v1043
        %v1050 = vmul.f32 %v1040, %v1042
        %v1051 = vmul.f32 %v1041, %v1043
        %vm1052 = vcmask 195584
        %v1053 = vsel %vm1052, %v1044, -inf
        %v1054 = vsel %vm1052, %v1045, -inf
        %v1055 = vmax.f32 %v1053, %v1054
        %v1056 = vrot.slane %v1055, 4
        %v1057 = vmax.f32 %v1055, %v1056
        %v1058 = vrot.slane %v1057, 2
        %v1059 = vmax.f32 %v1057, %v1058
        %v1060 = vrot.slane %v1059, 1
        %v1061 = vmax.f32 %v1059, %v1060
        %v1062 = vsel %vm1052, %v1046, -inf
        %v1063 = vsel %vm1052, %v1047, -inf
        %v1064 = vmax.f32 %v1062, %v1063
        %v1065 = vrot.slane %v1064, 4
        %v1066 = vmax.f32 %v1064, %v1065
        %v1067 = vrot.slane %v1066, 2
        %v1068 = vmax.f32 %v1066, %v1067
        %v1069 = vrot.slane %v1068, 1
        %v1070 = vmax.f32 %v1068, %v1069
        %v1071 = vsel %vm1052, %v1048, -inf
        %v1072 = vsel %vm1052, %v1049, -inf
        %v1073 = vmax.f32 %v1071, %v1072
        %v1074 = vrot.slane %v1073, 4
        %v1075 = vmax.f32 %v1073, %v1074
        %v1076 = vrot.slane %v1075, 2
        %v1077 = vmax.f32 %v1075, %v1076
        %v1078 = vrot.slane %v1077, 1
        %v1079 = vmax.f32 %v1077, %v1078
        %v1080 = vsel %vm1052, %v1050, -inf
        %v1081 = vsel %vm1052, %v1051, -inf
        %v1082 = vmax.f32 %v1080, %v1081
        %v1083 = vrot.slane %v1082, 4
        %v1084 = vmax.f32 %v1082, %v1083
        %v1085 = vrot.slane %v1084, 2
        %v1086 = vmax.f32 %v1084, %v1085
        %v1087 = vrot.slane %v1086, 1
        %v1088 = vmax.f32 %v1086, %v1087
        %v1089 = vld [vmem:[%s7] sm:$0xff]
        %v1090 = vld [vmem:[%s7 + $0x8] sm:$0xff]
        %v1091 = vld [vmem:[%s7 + $0x10] sm:$0xff]
        %v1092 = vld [vmem:[%s8] sm:$0x1]
        %v1094 = vperm.slane %v1092, 0
        %vm1100 = vcmask 1041409
        %v1101 = vsel %vm1100, %v1070, %v1061
        %vm1102 = vcmask 1042434
        %v1103 = vsel %vm1102, %v1079, %v1101
        %vm1104 = vcmask 1043459
        %v1105 = vsel %vm1104, %v1088, %v1103
        %v1106 = vsel %vm1052, %v1105, 0
        %1108 = vmatpush.msra.mxu0 0.0
        %1109 = vmatpush.msra.mxu0 0.0
        %1110 = vmatpush.msra.mxu0 0.0
        %1111 = vmatpush.msra.mxu0 0.0
        %1112 = vmatpush.msra.mxu0 0.0
        %1113 = vmatpush.msra.mxu0 0.0
        %1114 = vmatpush.msra.mxu0 0.0
        %1115 = vmatpush.msra.mxu0 0.0
        %1116 = vmatpush.msra.mxu0 0.0
        %1117 = vmatpush.msra.mxu0 0.0
        %1118 = vmatpush.msra.mxu0 0.0
        %1119 = vmatpush.msra.mxu0 0.0
        %1120 = vmatpush.msra.mxu0 0.0
        %1121 = vmatpush.msra.mxu0 %v1091
        %1122 = vmatpush.msra.mxu0 %v1090
        %1123 = vmatpush.msra.mxu0 %v1089
        %1124 = vmatmul.f32.gmra.mxu0 %v1106
        %v1125 = vpop.f32.mrf.mxu0
        %v1126 = vadd.f32 %v1094, %v1125
        %1127 = vdwg.mxu0
        %1128 = vst [vmem:[%s266] sm:$0xf] %v1126
        %s1129 = sand.u32 %s186, 1
        %s1130 = scalar_lea.sflag [#allocation7], %s1129
        %s1131 = sand.u32 %s186, 1
        %s1132 = smul.addr %s1131, 4
        %s1133 = scalar_lea.vmem [#allocation6], %s1132
        // Predicated region
        $region330: #{tpu_custom_call.1} parent=47 // pred_check
          %p1134 = pneg %p196
        $region331: #{tpu_custom_call.1} parent=47 // pred_check_branch
          %1136 = sbr.rel (%p1134) target = $region333
        $region332: #{tpu_custom_call.1} parent=47 // pred_region
          %1138 = vsyncadd %s1130, 0
          %s1139 = smul.addr %s31, 4
          %s1140 = scalar_lea.hbm %s9, %s1139
          %s1142 = sshll.u32 %s1133, 4
          %s1143 = int_to_ptr.vmem [resolvable:$true] %s1142
          %s1144 = sshll.u32 %s1140, 4
          %s1145 = int_to_ptr.hbm [resolvable:$true] %s1144
          %1147 = dma.vmem_to_hbm [thread:$0]  %s1143, 64, %s1145, %s1130
        $region333: #{tpu_custom_call.1} parent=47 // pred_fallthru
          _
      $region48: #{tpu_custom_call.1} parent=5 // pred_fallthru
        _
      %p1148 = scmp.le.s32.totalorder 2, %s26
      // Predicated region
      $region334: #{tpu_custom_call.1} parent=5 // pred_check
        %p1149 = pneg %p1148
      $region335: #{tpu_custom_call.1} parent=5 // pred_check_branch
        %1151 = sbr.rel (%p1149) target = $region337
      $region336: #{tpu_custom_call.1} parent=5 // pred_region
        %s1152 = ssub.s32 %s26, 2
        // Predicated region
        $region338: #{tpu_custom_call.1} parent=336 // pred_check
          %p1153 = pneg %p202
        $region339: #{tpu_custom_call.1} parent=336 // pred_check_branch
          %1155 = sbr.rel (%p1153) target = $region341
        $region340: #{tpu_custom_call.1} parent=336 // pred_region
          %s1156 = sand.u32 %s187, 1
          %s1157 = scalar_lea.sflag [#allocation7], %s1156
          %s1158 = sand.u32 %s187, 1
          %s1159 = smul.addr %s1158, 4
          %s1160 = scalar_lea.vmem [#allocation6], %s1159
          %1162 = dma.done %s1157, 64
        $region341: #{tpu_custom_call.1} parent=336 // pred_fallthru
          _
      $region337: #{tpu_custom_call.1} parent=5 // pred_fallthru
        _
    $region6: #{tpu_custom_call.1} parent=1 // loop_footer
      %s30 = sadd.s32 1, %s26
    $region7: #{tpu_custom_call.1} parent=1 // loop_footer_branch
      %25 = sbr.rel target = $region3
    $region8: #{tpu_custom_call.1} parent=1 // loop_exit
      _
    %1163 = vsyncpa [#allocation7], 1
    %s1164 = scalar_lea.sflag [#allocation7], 1
    %1165 = vsyncpa %s1164, 1
  %1166 = vsyncmov [#allocation3]
  %s1167 = vpop.sfrf %1166
  %p1168 = scmp.eq.s32.totalorder %s1167, 0
  %p1169 = pneg %p1168
  %1171 = shalt.err (%p1169)
  %s1172 = scalar_lea.sflag [#allocation3], 1
  %1173 = vsyncmov %s1172
  %s1174 = vpop.sfrf %1173
  %p1175 = scmp.eq.s32.totalorder %s1174, 0
  %p1176 = pneg %p1175
  %1178 = shalt.err (%p1176)
  %s1179 = scalar_lea.sflag [#allocation3], 2
  %1180 = vsyncmov %s1179
  %s1181 = vpop.sfrf %1180
  %p1182 = scmp.eq.s32.totalorder %s1181, 0
  %p1183 = pneg %p1182
  %1185 = shalt.err (%p1183)
  %s1186 = scalar_lea.sflag [#allocation3], 3
  %1187 = vsyncmov %s1186
  %s1188 = vpop.sfrf %1187
  %p1189 = scmp.eq.s32.totalorder %s1188, 0
  %p1190 = pneg %p1189
  %1192 = shalt.err (%p1190)
  %s1193 = scalar_lea.sflag [#allocation3], 4
  %1194 = vsyncmov %s1193
  %s1195 = vpop.sfrf %1194
  %p1196 = scmp.eq.s32.totalorder %s1195, 0
  %p1197 = pneg %p1196
  %1199 = shalt.err (%p1197)
  %s1200 = scalar_lea.sflag [#allocation3], 5
  %1201 = vsyncmov %s1200
  %s1202 = vpop.sfrf %1201
  %p1203 = scmp.eq.s32.totalorder %s1202, 0
  %p1204 = pneg %p1203
  %1206 = shalt.err (%p1204)
  %s1207 = scalar_lea.sflag [#allocation3], 6
  %1208 = vsyncmov %s1207
  %s1209 = vpop.sfrf %1208
  %p1210 = scmp.eq.s32.totalorder %s1209, 0
  %p1211 = pneg %p1210
  %1213 = shalt.err (%p1211)
  %s1214 = scalar_lea.sflag [#allocation3], 7
  %1215 = vsyncmov %s1214
  %s1216 = vpop.sfrf %1215
  %p1217 = scmp.eq.s32.totalorder %s1216, 0
  %p1218 = pneg %p1217
  %1220 = shalt.err (%p1218)

</llo_original>
